<compile_context>
chip_gen: v5e
topology: v5e:2x2
jax: 0.10.0
libtpu: 0.0.40
codegen_flags: <defaults>
</compile_context>

<pallas_src>
import jax
import jax.numpy as jnp
from jax.experimental import pallas as pl
from jax.experimental.pallas import tpu as pltpu

HIDDEN = 512
TILE_B = 256          # large-batch tile: fills 256-wide MXU (v6e/v7x), fine on v5e
LANE = 128            # lane width / K- and N-padding granularity
SUBLANE_BF16 = 16     # bf16 sublane tile -> minimum batch-tile granularity


def _round_up(x, m):
    return ((x + m - 1) // m) * m


def _mlp_kernel(x_ref, w1_ref, b1_ref, w2_ref, b2_ref, w3_ref, b3_ref, o_ref):
    # One batch tile per grid step; all weights resident in VMEM across steps.
    x = x_ref[...]                                    # f32 (tile_b, k_pad)

    # bf16 MXU inputs, f32 accumulation; bias add / ReLU kept in f32.
    h1 = jnp.dot(x.astype(jnp.bfloat16), w1_ref[...],
                 preferred_element_type=jnp.float32)
    h1 = jnp.maximum(h1 + b1_ref[...], 0.0)

    h2 = jnp.dot(h1.astype(jnp.bfloat16), w2_ref[...],
                 preferred_element_type=jnp.float32)
    h2 = jnp.maximum(h2 + b2_ref[...], 0.0)

    logits = jnp.dot(h2.astype(jnp.bfloat16), w3_ref[...],
                     preferred_element_type=jnp.float32) + b3_ref[...]
    o_ref[...] = logits.astype(o_ref.dtype)           # bf16 lane-dense store


def prepare_params(params):
    """One-time preprocessing of the PyTorch-equivalent f32 params.

    - casts weights to bf16 (MXU-native, halves weight HBM traffic)
    - zero-pads w1's K (input-feature) dim up to a multiple of 128
    - zero-pads w3/b3's output dim up to a multiple of 128 (lane-dense output)
    Biases stay f32 for the f32 epilogue.
    """
    w1, b1, w2, b2, w3, b3 = params
    d_in, hidden = w1.shape
    out_dim = w3.shape[1]

    k_pad = _round_up(d_in, LANE)
    out_pad = _round_up(out_dim, LANE)

    w1p = jnp.zeros((k_pad, hidden), jnp.bfloat16).at[:d_in, :].set(
        w1.astype(jnp.bfloat16))
    w2b = w2.astype(jnp.bfloat16)
    w3p = jnp.zeros((hidden, out_pad), jnp.bfloat16).at[:, :out_dim].set(
        w3.astype(jnp.bfloat16))
    b3p = jnp.zeros((1, out_pad), jnp.float32).at[:, :out_dim].set(b3)

    return {
        "w1": w1p, "b1": b1, "w2": w2b, "b2": b2, "w3": w3p, "b3": b3p,
        "d_in": d_in, "k_pad": k_pad, "hidden": hidden,
        "out_dim": out_dim, "out_pad": out_pad,
    }


def mlp_forward(x, prepped, *, tile_b=TILE_B):
    """x: (B, ...) float32 (flattened to (B, d_in)). Returns (B, out_dim) f32 logits."""
    # nn.Flatten
    x = x.reshape(x.shape[0], -1)
    B, d_in = x.shape
    assert d_in == prepped["d_in"], "input feature dim mismatch with prepared params"

    k_pad = prepped["k_pad"]
    hidden = prepped["hidden"]
    out_dim = prepped["out_dim"]
    out_pad = prepped["out_pad"]

    # Adaptive batch tile: tiny batches only pad to the bf16 sublane tile (16),
    # large batches use the full MXU-filling tile.
    if B < tile_b:
        tile_b = max(SUBLANE_BF16, _round_up(B, SUBLANE_BF16))
    b_pad = _round_up(B, tile_b)

    # Single pad op for the activations (batch rows + feature lanes).
    if b_pad != B or k_pad != d_in:
        x = jnp.zeros((b_pad, k_pad), x.dtype).at[:B, :d_in].set(x)

    grid = (b_pad // tile_b,)

    flops = 2 * b_pad * (k_pad * hidden + hidden * hidden + hidden * out_pad)
    bytes_accessed = (
        b_pad * k_pad * 4                                               # x (f32)
        + (k_pad * hidden + hidden * hidden + hidden * out_pad) * 2     # bf16 weights
        + (2 * hidden + out_pad) * 4                                    # f32 biases
        + b_pad * out_pad * 2                                           # bf16 output
    )

    out = pl.pallas_call(
        _mlp_kernel,
        out_shape=jax.ShapeDtypeStruct((b_pad, out_pad), jnp.bfloat16),
        grid_spec=pltpu.PrefetchScalarGridSpec(
            num_scalar_prefetch=0,
            grid=grid,
            in_specs=[
                pl.BlockSpec((tile_b, k_pad), lambda i: (i, 0)),    # x tile per step
                pl.BlockSpec((k_pad, hidden), lambda i: (0, 0)),    # weights resident
                pl.BlockSpec((1, hidden), lambda i: (0, 0)),
                pl.BlockSpec((hidden, hidden), lambda i: (0, 0)),
                pl.BlockSpec((1, hidden), lambda i: (0, 0)),
                pl.BlockSpec((hidden, out_pad), lambda i: (0, 0)),
                pl.BlockSpec((1, out_pad), lambda i: (0, 0)),
            ],
            out_specs=pl.BlockSpec((tile_b, out_pad), lambda i: (i, 0)),
        ),
        compiler_params=pltpu.CompilerParams(
            dimension_semantics=("parallel",),        # megacore-shard batch when grid > 1
        ),
        cost_estimate=pl.CostEstimate(
            flops=flops, transcendentals=0, bytes_accessed=bytes_accessed),
    )(x, prepped["w1"], prepped["b1"], prepped["w2"], prepped["b2"],
      prepped["w3"], prepped["b3"])

    # Slice padding off and promote bf16 logits back to f32 outside the kernel.
    return out[:B, :out_dim].astype(jnp.float32)


def init_params(key, input_shape, output_shape, hidden=HIDDEN):
    """Deterministic init mimicking nn.Linear's U(-1/sqrt(fan_in), +1/sqrt(fan_in))."""
    def linear(k, fan_in, fan_out):
        kw, kb = jax.random.split(k)
        bound = 1.0 / jnp.sqrt(fan_in)
        w = jax.random.uniform(kw, (fan_in, fan_out), jnp.float32, -bound, bound)
        b = jax.random.uniform(kb, (1, fan_out), jnp.float32, -bound, bound)
        return w, b

    k1, k2, k3 = jax.random.split(key, 3)
    w1, b1 = linear(k1, input_shape, hidden)
    w2, b2 = linear(k2, hidden, hidden)
    w3, b3 = linear(k3, hidden, output_shape)
    return (w1, b1, w2, b2, w3, b3)


def reference_forward_matched(x, params):
    """Same numerics as the kernel: bf16 MXU inputs, f32 accumulate, bf16 output store."""
    w1, b1, w2, b2, w3, b3 = params
    x = x.reshape(x.shape[0], -1)
    h1 = jnp.maximum(
        jnp.dot(x.astype(jnp.bfloat16), w1.astype(jnp.bfloat16),
                preferred_element_type=jnp.float32) + b1, 0.0)
    h2 = jnp.maximum(
        jnp.dot(h1.astype(jnp.bfloat16), w2.astype(jnp.bfloat16),
                preferred_element_type=jnp.float32) + b2, 0.0)
    logits = jnp.dot(h2.astype(jnp.bfloat16), w3.astype(jnp.bfloat16),
                     preferred_element_type=jnp.float32) + b3
    return logits.astype(jnp.bfloat16).astype(jnp.float32)


def reference_forward_f32(x, params):
    w1, b1, w2, b2, w3, b3 = params
    x = x.reshape(x.shape[0], -1)
    h1 = jnp.maximum(x @ w1 + b1, 0.0)
    h2 = jnp.maximum(h1 @ w2 + b2, 0.0)
    return h2 @ w3 + b3


if __name__ == "__main__":
    # Heart-disease tabular data: 13 features, 2 output classes, small batch.
    input_shape, output_shape = 13, 2
    batch = 8

    key = jax.random.PRNGKey(0)
    kx, kp = jax.random.split(key)

    # x arrives as (batch, input_shape); nn.Flatten is a no-op for 2-D input.
    x = jax.random.normal(kx, (batch, input_shape), dtype=jnp.float32)
    params = init_params(kp, input_shape, output_shape)

    # One-time weight preprocessing (bf16 cast + padding), reused across calls.
    prepped = prepare_params(params)

    logits = mlp_forward(x, prepped)
    logits = jax.block_until_ready(logits)
    assert logits.shape == (batch, output_shape)

    # Check vs a reference using identical bf16-input / f32-accumulate / bf16-store math.
    ref_matched = reference_forward_matched(x, params)
    assert jnp.allclose(logits, ref_matched, atol=2e-2, rtol=2e-2), \
        "mismatch vs matched bf16 reference"

    # Loose sanity check vs the pure-f32 PyTorch-equivalent forward.
    ref_f32 = reference_forward_f32(x, params)
    assert jnp.allclose(logits, ref_f32, atol=1e-1, rtol=1e-1), \
        "mismatch vs f32 reference"

    print("KERNEL_OK")
</pallas_src>

<mosaic_0001>
module attributes {stable_mosaic.version = 11 : i64} {
  func.func @_mlp_kernel(%arg0: i32, %arg1: memref<16x128xf32, #tpu.memory_space<vmem>>, %arg2: memref<128x512xbf16, #tpu.memory_space<vmem>>, %arg3: memref<1x512xf32, #tpu.memory_space<vmem>>, %arg4: memref<512x512xbf16, #tpu.memory_space<vmem>>, %arg5: memref<1x512xf32, #tpu.memory_space<vmem>>, %arg6: memref<512x128xbf16, #tpu.memory_space<vmem>>, %arg7: memref<1x128xf32, #tpu.memory_space<vmem>>, %arg8: memref<16x128xbf16, #tpu.memory_space<vmem>>) attributes {dimension_semantics = [#tpu.dimension_semantics<parallel>], iteration_bounds = array<i64: 1>, scalar_prefetch = 0 : i64, scratch_operands = 0 : i64, tpu.core_type = #tpu.core_type<tc>, window_params = [{transform_indices = @transform_0, window_bounds = array<i64: 16, 128>}, {pipeline_mode = #tpu.pipeline_mode<synchronous>, transform_indices = @transform_1, window_bounds = array<i64: 128, 512>}, {pipeline_mode = #tpu.pipeline_mode<synchronous>, transform_indices = @transform_2, window_bounds = array<i64: 1, 512>}, {pipeline_mode = #tpu.pipeline_mode<synchronous>, transform_indices = @transform_3, window_bounds = array<i64: 512, 512>}, {pipeline_mode = #tpu.pipeline_mode<synchronous>, transform_indices = @transform_4, window_bounds = array<i64: 1, 512>}, {pipeline_mode = #tpu.pipeline_mode<synchronous>, transform_indices = @transform_5, window_bounds = array<i64: 512, 128>}, {pipeline_mode = #tpu.pipeline_mode<synchronous>, transform_indices = @transform_6, window_bounds = array<i64: 1, 128>}, {transform_indices = @transform_7, window_bounds = array<i64: 16, 128>}]} {
    %c0 = arith.constant 0 : index
    %c0_0 = arith.constant 0 : index
    %0 = vector.load %arg1[%c0, %c0_0] : memref<16x128xf32, #tpu.memory_space<vmem>>, vector<16x128xf32>
    %1 = arith.truncf %0 : vector<16x128xf32> to vector<16x128xbf16>
    %c0_1 = arith.constant 0 : index
    %c0_2 = arith.constant 0 : index
    %2 = vector.load %arg2[%c0_1, %c0_2] : memref<128x512xbf16, #tpu.memory_space<vmem>>, vector<128x512xbf16>
    %cst = arith.constant dense<0.000000e+00> : vector<16x512xf32>
    %3 = tpu.matmul %1, %2, %cst {dimension_numbers = #tpu.dot_dimension_numbers<[1], [0], [0], [1], [0, 0, 1, 1], [], []>} : vector<16x128xbf16>, vector<128x512xbf16>, vector<16x512xf32> -> vector<16x512xf32>
    %c0_3 = arith.constant 0 : index
    %c0_4 = arith.constant 0 : index
    %4 = vector.load %arg3[%c0_3, %c0_4] : memref<1x512xf32, #tpu.memory_space<vmem>>, vector<1x512xf32>
    %5 = vector.broadcast %4 : vector<1x512xf32> to vector<16x512xf32>
    %6 = arith.addf %3, %5 : vector<16x512xf32>
    %cst_5 = arith.constant 0.000000e+00 : f32
    %7 = vector.broadcast %cst_5 : f32 to vector<16x512xf32>
    %8 = arith.maximumf %6, %7 : vector<16x512xf32>
    %9 = arith.truncf %8 : vector<16x512xf32> to vector<16x512xbf16>
    %c0_6 = arith.constant 0 : index
    %c0_7 = arith.constant 0 : index
    %10 = vector.load %arg4[%c0_6, %c0_7] : memref<512x512xbf16, #tpu.memory_space<vmem>>, vector<512x512xbf16>
    %cst_8 = arith.constant dense<0.000000e+00> : vector<16x512xf32>
    %11 = tpu.matmul %9, %10, %cst_8 {dimension_numbers = #tpu.dot_dimension_numbers<[1], [0], [0], [1], [0, 0, 1, 1], [], []>} : vector<16x512xbf16>, vector<512x512xbf16>, vector<16x512xf32> -> vector<16x512xf32>
    %c0_9 = arith.constant 0 : index
    %c0_10 = arith.constant 0 : index
    %12 = vector.load %arg5[%c0_9, %c0_10] : memref<1x512xf32, #tpu.memory_space<vmem>>, vector<1x512xf32>
    %13 = vector.broadcast %12 : vector<1x512xf32> to vector<16x512xf32>
    %14 = arith.addf %11, %13 : vector<16x512xf32>
    %cst_11 = arith.constant 0.000000e+00 : f32
    %15 = vector.broadcast %cst_11 : f32 to vector<16x512xf32>
    %16 = arith.maximumf %14, %15 : vector<16x512xf32>
    %17 = arith.truncf %16 : vector<16x512xf32> to vector<16x512xbf16>
    %c0_12 = arith.constant 0 : index
    %c0_13 = arith.constant 0 : index
    %18 = vector.load %arg6[%c0_12, %c0_13] : memref<512x128xbf16, #tpu.memory_space<vmem>>, vector<512x128xbf16>
    %cst_14 = arith.constant dense<0.000000e+00> : vector<16x128xf32>
    %19 = tpu.matmul %17, %18, %cst_14 {dimension_numbers = #tpu.dot_dimension_numbers<[1], [0], [0], [1], [0, 0, 1, 1], [], []>} : vector<16x512xbf16>, vector<512x128xbf16>, vector<16x128xf32> -> vector<16x128xf32>
    %c0_15 = arith.constant 0 : index
    %c0_16 = arith.constant 0 : index
    %20 = vector.load %arg7[%c0_15, %c0_16] : memref<1x128xf32, #tpu.memory_space<vmem>>, vector<1x128xf32>
    %21 = vector.broadcast %20 : vector<1x128xf32> to vector<16x128xf32>
    %22 = arith.addf %19, %21 : vector<16x128xf32>
    %23 = arith.truncf %22 : vector<16x128xf32> to vector<16x128xbf16>
    %c0_17 = arith.constant 0 : index
    %c0_18 = arith.constant 0 : index
    %24 = vector.load %arg8[%c0_17, %c0_18] : memref<16x128xbf16, #tpu.memory_space<vmem>>, vector<16x128xbf16>
    tpu.vector_store %arg8[%c0_17, %c0_18], %23 {strides = array<i32>} : memref<16x128xbf16, #tpu.memory_space<vmem>>, vector<16x128xbf16>,
    return
  }
  func.func @transform_0(%arg0: i32) -> (i32, i32) {
    %c0_i32 = arith.constant 0 : i32
    %c0_i32_0 = arith.constant 0 : i32
    return %arg0, %c0_i32 : i32, i32
  }
  func.func @transform_1(%arg0: i32) -> (i32, i32) {
    %c0_i32 = arith.constant 0 : i32
    %c0_i32_0 = arith.constant 0 : i32
    %c0_i32_1 = arith.constant 0 : i32
    return %c0_i32, %c0_i32_0 : i32, i32
  }
  func.func @transform_2(%arg0: i32) -> (i32, i32) {
    %c0_i32 = arith.constant 0 : i32
    %c0_i32_0 = arith.constant 0 : i32
    %c0_i32_1 = arith.constant 0 : i32
    return %c0_i32, %c0_i32_0 : i32, i32
  }
  func.func @transform_3(%arg0: i32) -> (i32, i32) {
    %c0_i32 = arith.constant 0 : i32
    %c0_i32_0 = arith.constant 0 : i32
    %c0_i32_1 = arith.constant 0 : i32
    return %c0_i32, %c0_i32_0 : i32, i32
  }
  func.func @transform_4(%arg0: i32) -> (i32, i32) {
    %c0_i32 = arith.constant 0 : i32
    %c0_i32_0 = arith.constant 0 : i32
    %c0_i32_1 = arith.constant 0 : i32
    return %c0_i32, %c0_i32_0 : i32, i32
  }
  func.func @transform_5(%arg0: i32) -> (i32, i32) {
    %c0_i32 = arith.constant 0 : i32
    %c0_i32_0 = arith.constant 0 : i32
    %c0_i32_1 = arith.constant 0 : i32
    return %c0_i32, %c0_i32_0 : i32, i32
  }
  func.func @transform_6(%arg0: i32) -> (i32, i32) {
    %c0_i32 = arith.constant 0 : i32
    %c0_i32_0 = arith.constant 0 : i32
    %c0_i32_1 = arith.constant 0 : i32
    return %c0_i32, %c0_i32_0 : i32, i32
  }
  func.func @transform_7(%arg0: i32) -> (i32, i32) {
    %c0_i32 = arith.constant 0 : i32
    %c0_i32_0 = arith.constant 0 : i32
    return %arg0, %c0_i32 : i32, i32
  }
}

</mosaic_0001>

<llo_original>
// kernel: tpu_custom_call.1
$region0: #{tpu_custom_call.1}
  #allocation0 [shape = 'u32[]', space=smem, size = 0x4, offset = 0x4, fixed_abs, tag = 'smem constant byte address 0x4 - core index']
  #allocation1 [shape = 'u32[72,128]{1,0:T(1,128)}', space=vmem, size = 0x9000, scoped, tag = 'internal scratch']
  %s0 = inlined_call_operand.hbm [shape: f32[16,128], index: 0, kind: input, shape index: {}]
  %s1 = inlined_call_operand.hbm [shape: bf16[128,512], index: 1, kind: input, shape index: {}]
  %s2 = inlined_call_operand.hbm [shape: f32[1,512], index: 2, kind: input, shape index: {}]
  %s3 = inlined_call_operand.hbm [shape: bf16[512,512], index: 3, kind: input, shape index: {}]
  %s4 = inlined_call_operand.hbm [shape: f32[1,512], index: 4, kind: input, shape index: {}]
  %s5 = inlined_call_operand.hbm [shape: bf16[512,128], index: 5, kind: input, shape index: {}]
  %s6 = inlined_call_operand.vmem [shape: f32[1,128], index: 6, kind: input, shape index: {}]
  %s7 = inlined_call_operand.hbm [shape: bf16[16,128], index: 7, kind: output, shape index: {}]
  %s8 = sld [smem:[#allocation0]]
  $region62: #{tpu_custom_call.1} parent=0
    _
  %s10 = ssub.s32 1, %s8
  %s11 = scalar_select 0, %s10, %s8
  $region1: #{tpu_custom_call.1} parent=0
    #allocation2 [shape = 'u8[8192]{0}', space=vmem, size = 0x2000, scoped, tag = 'input window, operand 0, single buffered']
    #allocation3 [shape = 's32[1]{0}', space=sflag, size = 0x4, scoped, tag = 'scoped memory for tpu_custom_call.1']
    #allocation4 [shape = 's32[1]{0}', space=sflag, size = 0x4, scoped, tag = 'scoped memory for tpu_custom_call.1']
    #allocation5 [shape = 'u8[131072]{0}', space=vmem, size = 0x20000, scoped, tag = 'input window, operand 1, single buffered']
    #allocation6 [shape = 's32[1]{0}', space=sflag, size = 0x4, scoped, tag = 'scoped memory for tpu_custom_call.1']
    #allocation7 [shape = 'u8[2048]{0}', space=vmem, size = 0x800, scoped, tag = 'input window, operand 2, single buffered']
    #allocation8 [shape = 'u8[524288]{0}', space=vmem, size = 0x80000, scoped, tag = 'input window, operand 3, single buffered']
    #allocation9 [shape = 's32[1]{0}', space=sflag, size = 0x4, scoped, tag = 'scoped memory for tpu_custom_call.1']
    #allocation10 [shape = 'u8[2048]{0}', space=vmem, size = 0x800, scoped, tag = 'input window, operand 4, single buffered']
    #allocation11 [shape = 'u8[131072]{0}', space=vmem, size = 0x20000, scoped, tag = 'input window, operand 5, single buffered']
    #allocation12 [shape = 's32[1]{0}', space=sflag, size = 0x4, scoped, tag = 'scoped memory for tpu_custom_call.1']
    #allocation13 [shape = 'u8[4096]{0}', space=vmem, size = 0x1000, scoped, tag = 'output window, operand 0, single buffered']
    %12 = vsyncpa [#allocation3], 0
    %13 = vsyncpa [#allocation6], 0
    %14 = vsyncpa [#allocation9], 0
    %15 = vsyncpa [#allocation12], 0
    %16 = vsyncpa [#allocation4], 0
    // Predicated region
    $region2: #{tpu_custom_call.1} parent=1 // pred_check
      _
    $region3: #{tpu_custom_call.1} parent=1 // pred_check_branch
      %18 = sbr.rel (0) target = $region5
    $region4: #{tpu_custom_call.1} parent=1 // pred_region
      %20 = vsyncadd [#allocation3], 0
      %s21 = sshll.u32 %s0, 4
      %s22 = int_to_ptr.hbm [resolvable:$true] %s21
      %s23 = sshll.u32 [#allocation2], 4
      %s24 = int_to_ptr.vmem [resolvable:$true] %s23
      %29 = dma.hbm_to_vmem [thread:$0]  %s22, 256, %s24, [#allocation3], 128, 128, 8
    $region5: #{tpu_custom_call.1} parent=1 // pred_fallthru
      _
    // Predicated region
    $region6: #{tpu_custom_call.1} parent=1 // pred_check
      _
    $region7: #{tpu_custom_call.1} parent=1 // pred_check_branch
      %31 = sbr.rel (0) target = $region9
    $region8: #{tpu_custom_call.1} parent=1 // pred_region
      %33 = vsyncadd [#allocation6], 0
      %s34 = sshll.u32 %s1, 4
      %s35 = int_to_ptr.hbm [resolvable:$true] %s34
      %s36 = sshll.u32 [#allocation5], 4
      %s37 = int_to_ptr.vmem [resolvable:$true] %s36
      %42 = dma.hbm_to_vmem [thread:$0]  %s35, 4096, %s37, [#allocation6], 256, 256, 16
    $region9: #{tpu_custom_call.1} parent=1 // pred_fallthru
      _
    // Predicated region
    $region10: #{tpu_custom_call.1} parent=1 // pred_check
      _
    $region11: #{tpu_custom_call.1} parent=1 // pred_check_branch
      %44 = sbr.rel (0) target = $region13
    $region12: #{tpu_custom_call.1} parent=1 // pred_region
      %46 = vsyncadd [#allocation6], 0
      %s48 = sshll.u32 %s2, 4
      %s49 = int_to_ptr.hbm [resolvable:$true] %s48
      %s50 = sshll.u32 [#allocation7], 4
      %s51 = int_to_ptr.vmem [resolvable:$true] %s50
      %53 = dma.hbm_to_vmem [thread:$0]  %s49, 64, %s51, [#allocation6]
    $region13: #{tpu_custom_call.1} parent=1 // pred_fallthru
      _
    // Predicated region
    $region14: #{tpu_custom_call.1} parent=1 // pred_check
      _
    $region15: #{tpu_custom_call.1} parent=1 // pred_check_branch
      %55 = sbr.rel (0) target = $region17
    $region16: #{tpu_custom_call.1} parent=1 // pred_region
      %57 = vsyncadd [#allocation9], 0
      %s58 = sshll.u32 %s3, 4
      %s59 = int_to_ptr.hbm [resolvable:$true] %s58
      %s60 = sshll.u32 [#allocation8], 4
      %s61 = int_to_ptr.vmem [resolvable:$true] %s60
      %66 = dma.hbm_to_vmem [thread:$0]  %s59, 16384, %s61, [#allocation9], 256, 256, 16
    $region17: #{tpu_custom_call.1} parent=1 // pred_fallthru
      _
    // Predicated region
    $region18: #{tpu_custom_call.1} parent=1 // pred_check
      _
    $region19: #{tpu_custom_call.1} parent=1 // pred_check_branch
      %68 = sbr.rel (0) target = $region21
    $region20: #{tpu_custom_call.1} parent=1 // pred_region
      %70 = vsyncadd [#allocation9], 0
      %s72 = sshll.u32 %s4, 4
      %s73 = int_to_ptr.hbm [resolvable:$true] %s72
      %s74 = sshll.u32 [#allocation10], 4
      %s75 = int_to_ptr.vmem [resolvable:$true] %s74
      %77 = dma.hbm_to_vmem [thread:$0]  %s73, 64, %s75, [#allocation9]
    $region21: #{tpu_custom_call.1} parent=1 // pred_fallthru
      _
    // Predicated region
    $region22: #{tpu_custom_call.1} parent=1 // pred_check
      _
    $region23: #{tpu_custom_call.1} parent=1 // pred_check_branch
      %79 = sbr.rel (0) target = $region25
    $region24: #{tpu_custom_call.1} parent=1 // pred_region
      %81 = vsyncadd [#allocation12], 0
      %s82 = sshll.u32 %s5, 4
      %s83 = int_to_ptr.hbm [resolvable:$true] %s82
      %s84 = sshll.u32 [#allocation11], 4
      %s85 = int_to_ptr.vmem [resolvable:$true] %s84
      %90 = dma.hbm_to_vmem [thread:$0]  %s83, 4096, %s85, [#allocation12], 64, 64, 4
    $region25: #{tpu_custom_call.1} parent=1 // pred_fallthru
      _
    // Predicated region
    $region26: #{tpu_custom_call.1} parent=1 // pred_check
      _
    $region27: #{tpu_custom_call.1} parent=1 // pred_check_branch
      %92 = sbr.rel (0) target = $region29
    $region28: #{tpu_custom_call.1} parent=1 // pred_region
      _
    $region29: #{tpu_custom_call.1} parent=1 // pred_fallthru
      _
    // Predicated region
    $region30: #{tpu_custom_call.1} parent=1 // pred_check
      _
    $region31: #{tpu_custom_call.1} parent=1 // pred_check_branch
      %94 = sbr.rel (0) target = $region33
    $region32: #{tpu_custom_call.1} parent=1 // pred_region
      %96 = dma.done [#allocation3], 256
    $region33: #{tpu_custom_call.1} parent=1 // pred_fallthru
      _
    // Predicated region
    $region34: #{tpu_custom_call.1} parent=1 // pred_check
      _
    $region35: #{tpu_custom_call.1} parent=1 // pred_check_branch
      %98 = sbr.rel (0) target = $region37
    $region36: #{tpu_custom_call.1} parent=1 // pred_region
      %100 = dma.done [#allocation6], 4096
    $region37: #{tpu_custom_call.1} parent=1 // pred_fallthru
      _
    // Predicated region
    $region38: #{tpu_custom_call.1} parent=1 // pred_check
      _
    $region39: #{tpu_custom_call.1} parent=1 // pred_check_branch
      %102 = sbr.rel (0) target = $region41
    $region40: #{tpu_custom_call.1} parent=1 // pred_region
      %104 = dma.done [#allocation6], 64
    $region41: #{tpu_custom_call.1} parent=1 // pred_fallthru
      _
    // Predicated region
    $region42: #{tpu_custom_call.1} parent=1 // pred_check
      _
    $region43: #{tpu_custom_call.1} parent=1 // pred_check_branch
      %106 = sbr.rel (0) target = $region45
    $region44: #{tpu_custom_call.1} parent=1 // pred_region
      %108 = dma.done [#allocation9], 16384
    $region45: #{tpu_custom_call.1} parent=1 // pred_fallthru
      _
    // Predicated region
    $region46: #{tpu_custom_call.1} parent=1 // pred_check
      _
    $region47: #{tpu_custom_call.1} parent=1 // pred_check_branch
      %110 = sbr.rel (0) target = $region49
    $region48: #{tpu_custom_call.1} parent=1 // pred_region
      %112 = dma.done [#allocation9], 64
    $region49: #{tpu_custom_call.1} parent=1 // pred_fallthru
      _
    // Predicated region
    $region50: #{tpu_custom_call.1} parent=1 // pred_check
      _
    $region51: #{tpu_custom_call.1} parent=1 // pred_check_branch
      %114 = sbr.rel (0) target = $region53
    $region52: #{tpu_custom_call.1} parent=1 // pred_region
      %116 = dma.done [#allocation12], 4096
    $region53: #{tpu_custom_call.1} parent=1 // pred_fallthru
      _
    %v117 = vld [vmem:[#allocation2] sm:$0xff]
    %v118 = vld [vmem:[#allocation2 + $0x8] sm:$0xff]
    %v119 = vpack.c.bf16 %v118, %v117
    %v120 = vld [vmem:[#allocation5] sm:$0xff]
    %v121 = vld [vmem:[#allocation5 + $0x8] sm:$0xff]
    %v122 = vld [vmem:[#allocation5 + $0x10] sm:$0xff]
    %v123 = vld [vmem:[#allocation5 + $0x18] sm:$0xff]
    %v124 = vld [vmem:[#allocation5 + $0x20] sm:$0xff]
    %v125 = vld [vmem:[#allocation5 + $0x28] sm:$0xff]
    %v126 = vld [vmem:[#allocation5 + $0x30] sm:$0xff]
    %v127 = vld [vmem:[#allocation5 + $0x38] sm:$0xff]
    %v128 = vld [vmem:[#allocation5 + $0x40] sm:$0xff]
    %v129 = vld [vmem:[#allocation5 + $0x48] sm:$0xff]
    %v130 = vld [vmem:[#allocation5 + $0x50] sm:$0xff]
    %v131 = vld [vmem:[#allocation5 + $0x58] sm:$0xff]
    %v132 = vld [vmem:[#allocation5 + $0x60] sm:$0xff]
    %v133 = vld [vmem:[#allocation5 + $0x68] sm:$0xff]
    %v134 = vld [vmem:[#allocation5 + $0x70] sm:$0xff]
    %v135 = vld [vmem:[#allocation5 + $0x78] sm:$0xff]
    %v136 = vld [vmem:[#allocation5 + $0x80] sm:$0xff]
    %v137 = vld [vmem:[#allocation5 + $0x88] sm:$0xff]
    %v138 = vld [vmem:[#allocation5 + $0x90] sm:$0xff]
    %v139 = vld [vmem:[#allocation5 + $0x98] sm:$0xff]
    %v140 = vld [vmem:[#allocation5 + $0xa0] sm:$0xff]
    %v141 = vld [vmem:[#allocation5 + $0xa8] sm:$0xff]
    %v142 = vld [vmem:[#allocation5 + $0xb0] sm:$0xff]
    %v143 = vld [vmem:[#allocation5 + $0xb8] sm:$0xff]
    %v144 = vld [vmem:[#allocation5 + $0xc0] sm:$0xff]
    %v145 = vld [vmem:[#allocation5 + $0xc8] sm:$0xff]
    %v146 = vld [vmem:[#allocation5 + $0xd0] sm:$0xff]
    %v147 = vld [vmem:[#allocation5 + $0xd8] sm:$0xff]
    %v148 = vld [vmem:[#allocation5 + $0xe0] sm:$0xff]
    %v149 = vld [vmem:[#allocation5 + $0xe8] sm:$0xff]
    %v150 = vld [vmem:[#allocation5 + $0xf0] sm:$0xff]
    %v151 = vld [vmem:[#allocation5 + $0xf8] sm:$0xff]
    %v152 = vld [vmem:[#allocation7] sm:$0xf]
    %v154 = vperm.slane %v152, 0
    %v155 = vperm.slane %v152, 1
    %v156 = vperm.slane %v152, 2
    %v157 = vperm.slane %v152, 3
    %v194 = vunpack.c.l.b16 %v120
    %v195 = vunpack.c.h.b16 %v120
    %v196 = vunpack.c.l.b16 %v121
    %v197 = vunpack.c.h.b16 %v121
    %v198 = vunpack.c.l.b16 %v122
    %v199 = vunpack.c.h.b16 %v122
    %v200 = vunpack.c.l.b16 %v123
    %v201 = vunpack.c.h.b16 %v123
    %v202 = vunpack.c.l.b16 %v124
    %v203 = vunpack.c.h.b16 %v124
    %v204 = vunpack.c.l.b16 %v125
    %v205 = vunpack.c.h.b16 %v125
    %v206 = vunpack.c.l.b16 %v126
    %v207 = vunpack.c.h.b16 %v126
    %v208 = vunpack.c.l.b16 %v127
    %v209 = vunpack.c.h.b16 %v127
    %v210 = vunpack.c.l.b16 %v128
    %v211 = vunpack.c.h.b16 %v128
    %v212 = vunpack.c.l.b16 %v129
    %v213 = vunpack.c.h.b16 %v129
    %v214 = vunpack.c.l.b16 %v130
    %v215 = vunpack.c.h.b16 %v130
    %v216 = vunpack.c.l.b16 %v131
    %v217 = vunpack.c.h.b16 %v131
    %v218 = vunpack.c.l.b16 %v132
    %v219 = vunpack.c.h.b16 %v132
    %v220 = vunpack.c.l.b16 %v133
    %v221 = vunpack.c.h.b16 %v133
    %v222 = vunpack.c.l.b16 %v134
    %v223 = vunpack.c.h.b16 %v134
    %v224 = vunpack.c.l.b16 %v135
    %v225 = vunpack.c.h.b16 %v135
    %v226 = vunpack.c.l.b16 %v136
    %v227 = vunpack.c.h.b16 %v136
    %v228 = vunpack.c.l.b16 %v137
    %v229 = vunpack.c.h.b16 %v137
    %v230 = vunpack.c.l.b16 %v138
    %v231 = vunpack.c.h.b16 %v138
    %v232 = vunpack.c.l.b16 %v139
    %v233 = vunpack.c.h.b16 %v139
    %v234 = vunpack.c.l.b16 %v140
    %v235 = vunpack.c.h.b16 %v140
    %v236 = vunpack.c.l.b16 %v141
    %v237 = vunpack.c.h.b16 %v141
    %v238 = vunpack.c.l.b16 %v142
    %v239 = vunpack.c.h.b16 %v142
    %v240 = vunpack.c.l.b16 %v143
    %v241 = vunpack.c.h.b16 %v143
    %v242 = vunpack.c.l.b16 %v144
    %v243 = vunpack.c.h.b16 %v144
    %v244 = vunpack.c.l.b16 %v145
    %v245 = vunpack.c.h.b16 %v145
    %v246 = vunpack.c.l.b16 %v146
    %v247 = vunpack.c.h.b16 %v146
    %v248 = vunpack.c.l.b16 %v147
    %v249 = vunpack.c.h.b16 %v147
    %v250 = vunpack.c.l.b16 %v148
    %v251 = vunpack.c.h.b16 %v148
    %v252 = vunpack.c.l.b16 %v149
    %v253 = vunpack.c.h.b16 %v149
    %v254 = vunpack.c.l.b16 %v150
    %v255 = vunpack.c.h.b16 %v150
    %v256 = vunpack.c.l.b16 %v151
    %v257 = vunpack.c.h.b16 %v151
    %v258 = vpack.c.b16 %v198, %v194
    %v259 = vpack.c.b16 %v199, %v195
    %v260 = vpack.c.b16 %v200, %v196
    %v261 = vpack.c.b16 %v201, %v197
    %v262 = vpack.c.b16 %v206, %v202
    %v263 = vpack.c.b16 %v207, %v203
    %v264 = vpack.c.b16 %v208, %v204
    %v265 = vpack.c.b16 %v209, %v205
    %v266 = vpack.c.b16 %v214, %v210
    %v267 = vpack.c.b16 %v215, %v211
    %v268 = vpack.c.b16 %v216, %v212
    %v269 = vpack.c.b16 %v217, %v213
    %v270 = vpack.c.b16 %v222, %v218
    %v271 = vpack.c.b16 %v223, %v219
    %v272 = vpack.c.b16 %v224, %v220
    %v273 = vpack.c.b16 %v225, %v221
    %v274 = vpack.c.b16 %v230, %v226
    %v275 = vpack.c.b16 %v231, %v227
    %v276 = vpack.c.b16 %v232, %v228
    %v277 = vpack.c.b16 %v233, %v229
    %v278 = vpack.c.b16 %v238, %v234
    %v279 = vpack.c.b16 %v239, %v235
    %v280 = vpack.c.b16 %v240, %v236
    %v281 = vpack.c.b16 %v241, %v237
    %v282 = vpack.c.b16 %v246, %v242
    %v283 = vpack.c.b16 %v247, %v243
    %v284 = vpack.c.b16 %v248, %v244
    %v285 = vpack.c.b16 %v249, %v245
    %v286 = vpack.c.b16 %v254, %v250
    %v287 = vpack.c.b16 %v255, %v251
    %v288 = vpack.c.b16 %v256, %v252
    %v289 = vpack.c.b16 %v257, %v253
    %322 = vmatpush.bf16.msra.mxu0 %v286
    %323 = vmatpush.bf16.msra.mxu0 %v282
    %324 = vmatpush.bf16.msra.mxu0 %v278
    %325 = vmatpush.bf16.msra.mxu0 %v274
    %326 = vmatpush.bf16.msra.mxu0 %v270
    %327 = vmatpush.bf16.msra.mxu0 %v266
    %328 = vmatpush.bf16.msra.mxu0 %v262
    %329 = vmatpush.bf16.msra.mxu0 %v258
    %330 = vmatmul.bf16.gmra.mxu0 %v119
    %v331 = vpop.f32.mrf.mxu0
    %v332 = vadd.f32 %v154, %v331
    %v333 = vpop.f32.mrf.mxu0
    %v334 = vadd.f32 %v154, %v333
    %335 = vdwg.mxu0
    %336 = vmatpush.bf16.msra.mxu0 %v287
    %337 = vmatpush.bf16.msra.mxu0 %v283
    %338 = vmatpush.bf16.msra.mxu0 %v279
    %339 = vmatpush.bf16.msra.mxu0 %v275
    %340 = vmatpush.bf16.msra.mxu0 %v271
    %341 = vmatpush.bf16.msra.mxu0 %v267
    %342 = vmatpush.bf16.msra.mxu0 %v263
    %343 = vmatpush.bf16.msra.mxu0 %v259
    %344 = vmatmul.bf16.gmra.mxu0 %v119
    %v345 = vpop.f32.mrf.mxu0
    %v346 = vadd.f32 %v155, %v345
    %v347 = vpop.f32.mrf.mxu0
    %v348 = vadd.f32 %v155, %v347
    %349 = vdwg.mxu0
    %350 = vmatpush.bf16.msra.mxu0 %v288
    %351 = vmatpush.bf16.msra.mxu0 %v284
    %352 = vmatpush.bf16.msra.mxu0 %v280
    %353 = vmatpush.bf16.msra.mxu0 %v276
    %354 = vmatpush.bf16.msra.mxu0 %v272
    %355 = vmatpush.bf16.msra.mxu0 %v268
    %356 = vmatpush.bf16.msra.mxu0 %v264
    %357 = vmatpush.bf16.msra.mxu0 %v260
    %358 = vmatmul.bf16.gmra.mxu0 %v119
    %v359 = vpop.f32.mrf.mxu0
    %v360 = vadd.f32 %v156, %v359
    %v361 = vpop.f32.mrf.mxu0
    %v362 = vadd.f32 %v156, %v361
    %363 = vdwg.mxu0
    %364 = vmatpush.bf16.msra.mxu0 %v289
    %365 = vmatpush.bf16.msra.mxu0 %v285
    %366 = vmatpush.bf16.msra.mxu0 %v281
    %367 = vmatpush.bf16.msra.mxu0 %v277
    %368 = vmatpush.bf16.msra.mxu0 %v273
    %369 = vmatpush.bf16.msra.mxu0 %v269
    %370 = vmatpush.bf16.msra.mxu0 %v265
    %371 = vmatpush.bf16.msra.mxu0 %v261
    %372 = vmatmul.bf16.gmra.mxu0 %v119
    %v373 = vpop.f32.mrf.mxu0
    %v374 = vadd.f32 %v157, %v373
    %v375 = vpop.f32.mrf.mxu0
    %v376 = vadd.f32 %v157, %v375
    %377 = vdwg.mxu0
    %v378 = vmax.f32 %v332, 0.0
    %v379 = vmax.f32 %v346, 0.0
    %v380 = vmax.f32 %v360, 0.0
    %v381 = vmax.f32 %v374, 0.0
    %v382 = vmax.f32 %v334, 0.0
    %v383 = vmax.f32 %v348, 0.0
    %v384 = vmax.f32 %v362, 0.0
    %v385 = vmax.f32 %v376, 0.0
    %v386 = vpack.c.bf16 %v382, %v378
    %v387 = vpack.c.bf16 %v383, %v379
    %v388 = vpack.c.bf16 %v384, %v380
    %v389 = vpack.c.bf16 %v385, %v381
    %v390 = vld [vmem:[#allocation8] sm:$0xff]
    %v391 = vld [vmem:[#allocation8 + $0x8] sm:$0xff]
    %v392 = vld [vmem:[#allocation8 + $0x10] sm:$0xff]
    %v393 = vld [vmem:[#allocation8 + $0x18] sm:$0xff]
    %v394 = vld [vmem:[#allocation8 + $0x20] sm:$0xff]
    %v395 = vld [vmem:[#allocation8 + $0x28] sm:$0xff]
    %v396 = vld [vmem:[#allocation8 + $0x30] sm:$0xff]
    %v397 = vld [vmem:[#allocation8 + $0x38] sm:$0xff]
    %v398 = vld [vmem:[#allocation8 + $0x40] sm:$0xff]
    %v399 = vld [vmem:[#allocation8 + $0x48] sm:$0xff]
    %v400 = vld [vmem:[#allocation8 + $0x50] sm:$0xff]
    %v401 = vld [vmem:[#allocation8 + $0x58] sm:$0xff]
    %v402 = vld [vmem:[#allocation8 + $0x60] sm:$0xff]
    %v403 = vld [vmem:[#allocation8 + $0x68] sm:$0xff]
    %v404 = vld [vmem:[#allocation8 + $0x70] sm:$0xff]
    %v405 = vld [vmem:[#allocation8 + $0x78] sm:$0xff]
    %v406 = vld [vmem:[#allocation8 + $0x80] sm:$0xff]
    %v407 = vld [vmem:[#allocation8 + $0x88] sm:$0xff]
    %v408 = vld [vmem:[#allocation8 + $0x90] sm:$0xff]
    %v409 = vld [vmem:[#allocation8 + $0x98] sm:$0xff]
    %v410 = vld [vmem:[#allocation8 + $0xa0] sm:$0xff]
    %v411 = vld [vmem:[#allocation8 + $0xa8] sm:$0xff]
    %v412 = vld [vmem:[#allocation8 + $0xb0] sm:$0xff]
    %v413 = vld [vmem:[#allocation8 + $0xb8] sm:$0xff]
    %v414 = vld [vmem:[#allocation8 + $0xc0] sm:$0xff]
    %v415 = vld [vmem:[#allocation8 + $0xc8] sm:$0xff]
    %v416 = vld [vmem:[#allocation8 + $0xd0] sm:$0xff]
    %v417 = vld [vmem:[#allocation8 + $0xd8] sm:$0xff]
    %v418 = vld [vmem:[#allocation8 + $0xe0] sm:$0xff]
    %v419 = vld [vmem:[#allocation8 + $0xe8] sm:$0xff]
    %v420 = vld [vmem:[#allocation8 + $0xf0] sm:$0xff]
    %v421 = vld [vmem:[#allocation8 + $0xf8] sm:$0xff]
    %v422 = vld [vmem:[#allocation8 + $0x100] sm:$0xff]
    %v423 = vld [vmem:[#allocation8 + $0x108] sm:$0xff]
    %v424 = vld [vmem:[#allocation8 + $0x110] sm:$0xff]
    %v425 = vld [vmem:[#allocation8 + $0x118] sm:$0xff]
    %v426 = vld [vmem:[#allocation8 + $0x120] sm:$0xff]
    %v427 = vld [vmem:[#allocation8 + $0x128] sm:$0xff]
    %v428 = vld [vmem:[#allocation8 + $0x130] sm:$0xff]
    %v429 = vld [vmem:[#allocation8 + $0x138] sm:$0xff]
    %v430 = vld [vmem:[#allocation8 + $0x140] sm:$0xff]
    %v431 = vld [vmem:[#allocation8 + $0x148] sm:$0xff]
    %v432 = vld [vmem:[#allocation8 + $0x150] sm:$0xff]
    %v433 = vld [vmem:[#allocation8 + $0x158] sm:$0xff]
    %v434 = vld [vmem:[#allocation8 + $0x160] sm:$0xff]
    %v435 = vld [vmem:[#allocation8 + $0x168] sm:$0xff]
    %v436 = vld [vmem:[#allocation8 + $0x170] sm:$0xff]
    %v437 = vld [vmem:[#allocation8 + $0x178] sm:$0xff]
    %v438 = vld [vmem:[#allocation8 + $0x180] sm:$0xff]
    %v439 = vld [vmem:[#allocation8 + $0x188] sm:$0xff]
    %v440 = vld [vmem:[#allocation8 + $0x190] sm:$0xff]
    %v441 = vld [vmem:[#allocation8 + $0x198] sm:$0xff]
    %v442 = vld [vmem:[#allocation8 + $0x1a0] sm:$0xff]
    %v443 = vld [vmem:[#allocation8 + $0x1a8] sm:$0xff]
    %v444 = vld [vmem:[#allocation8 + $0x1b0] sm:$0xff]
    %v445 = vld [vmem:[#allocation8 + $0x1b8] sm:$0xff]
    %v446 = vld [vmem:[#allocation8 + $0x1c0] sm:$0xff]
    %v447 = vld [vmem:[#allocation8 + $0x1c8] sm:$0xff]
    %v448 = vld [vmem:[#allocation8 + $0x1d0] sm:$0xff]
    %v449 = vld [vmem:[#allocation8 + $0x1d8] sm:$0xff]
    %v450 = vld [vmem:[#allocation8 + $0x1e0] sm:$0xff]
    %v451 = vld [vmem:[#allocation8 + $0x1e8] sm:$0xff]
    %v452 = vld [vmem:[#allocation8 + $0x1f0] sm:$0xff]
    %v453 = vld [vmem:[#allocation8 + $0x1f8] sm:$0xff]
    %v454 = vld [vmem:[#allocation8 + $0x200] sm:$0xff]
    %v455 = vld [vmem:[#allocation8 + $0x208] sm:$0xff]
    %v456 = vld [vmem:[#allocation8 + $0x210] sm:$0xff]
    %v457 = vld [vmem:[#allocation8 + $0x218] sm:$0xff]
    %v458 = vld [vmem:[#allocation8 + $0x220] sm:$0xff]
    %v459 = vld [vmem:[#allocation8 + $0x228] sm:$0xff]
    %v460 = vld [vmem:[#allocation8 + $0x230] sm:$0xff]
    %v461 = vld [vmem:[#allocation8 + $0x238] sm:$0xff]
    %v462 = vld [vmem:[#allocation8 + $0x240] sm:$0xff]
    %v463 = vld [vmem:[#allocation8 + $0x248] sm:$0xff]
    %v464 = vld [vmem:[#allocation8 + $0x250] sm:$0xff]
    %v465 = vld [vmem:[#allocation8 + $0x258] sm:$0xff]
    %v466 = vld [vmem:[#allocation8 + $0x260] sm:$0xff]
    %v467 = vld [vmem:[#allocation8 + $0x268] sm:$0xff]
    %v468 = vld [vmem:[#allocation8 + $0x270] sm:$0xff]
    %v469 = vld [vmem:[#allocation8 + $0x278] sm:$0xff]
    %v470 = vld [vmem:[#allocation8 + $0x280] sm:$0xff]
    %v471 = vld [vmem:[#allocation8 + $0x288] sm:$0xff]
    %v472 = vld [vmem:[#allocation8 + $0x290] sm:$0xff]
    %v473 = vld [vmem:[#allocation8 + $0x298] sm:$0xff]
    %v474 = vld [vmem:[#allocation8 + $0x2a0] sm:$0xff]
    %v475 = vld [vmem:[#allocation8 + $0x2a8] sm:$0xff]
    %v476 = vld [vmem:[#allocation8 + $0x2b0] sm:$0xff]
    %v477 = vld [vmem:[#allocation8 + $0x2b8] sm:$0xff]
    %v478 = vld [vmem:[#allocation8 + $0x2c0] sm:$0xff]
    %v479 = vld [vmem:[#allocation8 + $0x2c8] sm:$0xff]
    %v480 = vld [vmem:[#allocation8 + $0x2d0] sm:$0xff]
    %v481 = vld [vmem:[#allocation8 + $0x2d8] sm:$0xff]
    %v482 = vld [vmem:[#allocation8 + $0x2e0] sm:$0xff]
    %v483 = vld [vmem:[#allocation8 + $0x2e8] sm:$0xff]
    %v484 = vld [vmem:[#allocation8 + $0x2f0] sm:$0xff]
    %v485 = vld [vmem:[#allocation8 + $0x2f8] sm:$0xff]
    %v486 = vld [vmem:[#allocation8 + $0x300] sm:$0xff]
    %v487 = vld [vmem:[#allocation8 + $0x308] sm:$0xff]
    %v488 = vld [vmem:[#allocation8 + $0x310] sm:$0xff]
    %v489 = vld [vmem:[#allocation8 + $0x318] sm:$0xff]
    %v490 = vld [vmem:[#allocation8 + $0x320] sm:$0xff]
    %v491 = vld [vmem:[#allocation8 + $0x328] sm:$0xff]
    %v492 = vld [vmem:[#allocation8 + $0x330] sm:$0xff]
    %v493 = vld [vmem:[#allocation8 + $0x338] sm:$0xff]
    %v494 = vld [vmem:[#allocation8 + $0x340] sm:$0xff]
    %v495 = vld [vmem:[#allocation8 + $0x348] sm:$0xff]
    %v496 = vld [vmem:[#allocation8 + $0x350] sm:$0xff]
    %v497 = vld [vmem:[#allocation8 + $0x358] sm:$0xff]
    %v498 = vld [vmem:[#allocation8 + $0x360] sm:$0xff]
    %v499 = vld [vmem:[#allocation8 + $0x368] sm:$0xff]
    %v500 = vld [vmem:[#allocation8 + $0x370] sm:$0xff]
    %v501 = vld [vmem:[#allocation8 + $0x378] sm:$0xff]
    %v502 = vld [vmem:[#allocation8 + $0x380] sm:$0xff]
    %v503 = vld [vmem:[#allocation8 + $0x388] sm:$0xff]
    %v504 = vld [vmem:[#allocation8 + $0x390] sm:$0xff]
    %v505 = vld [vmem:[#allocation8 + $0x398] sm:$0xff]
    %v506 = vld [vmem:[#allocation8 + $0x3a0] sm:$0xff]
    %v507 = vld [vmem:[#allocation8 + $0x3a8] sm:$0xff]
    %v508 = vld [vmem:[#allocation8 + $0x3b0] sm:$0xff]
    %v509 = vld [vmem:[#allocation8 + $0x3b8] sm:$0xff]
    %v510 = vld [vmem:[#allocation8 + $0x3c0] sm:$0xff]
    %v511 = vld [vmem:[#allocation8 + $0x3c8] sm:$0xff]
    %v512 = vld [vmem:[#allocation8 + $0x3d0] sm:$0xff]
    %v513 = vld [vmem:[#allocation8 + $0x3d8] sm:$0xff]
    %v514 = vld [vmem:[#allocation8 + $0x3e0] sm:$0xff]
    %v515 = vld [vmem:[#allocation8 + $0x3e8] sm:$0xff]
    %v516 = vld [vmem:[#allocation8 + $0x3f0] sm:$0xff]
    %v517 = vld [vmem:[#allocation8 + $0x3f8] sm:$0xff]
    %v518 = vld [vmem:[#allocation10] sm:$0xf]
    %v520 = vperm.slane %v518, 0
    %v521 = vperm.slane %v518, 1
    %v522 = vperm.slane %v518, 2
    %v523 = vperm.slane %v518, 3
    %v656 = vunpack.c.l.b16 %v390
    %v657 = vunpack.c.h.b16 %v390
    %v658 = vunpack.c.l.b16 %v391
    %v659 = vunpack.c.h.b16 %v391
    %v660 = vunpack.c.l.b16 %v392
    %v661 = vunpack.c.h.b16 %v392
    %v662 = vunpack.c.l.b16 %v393
    %v663 = vunpack.c.h.b16 %v393
    %v664 = vunpack.c.l.b16 %v394
    %v665 = vunpack.c.h.b16 %v394
    %v666 = vunpack.c.l.b16 %v395
    %v667 = vunpack.c.h.b16 %v395
    %v668 = vunpack.c.l.b16 %v396
    %v669 = vunpack.c.h.b16 %v396
    %v670 = vunpack.c.l.b16 %v397
    %v671 = vunpack.c.h.b16 %v397
    %v672 = vunpack.c.l.b16 %v398
    %v673 = vunpack.c.h.b16 %v398
    %v674 = vunpack.c.l.b16 %v399
    %v675 = vunpack.c.h.b16 %v399
    %v676 = vunpack.c.l.b16 %v400
    %v677 = vunpack.c.h.b16 %v400
    %v678 = vunpack.c.l.b16 %v401
    %v679 = vunpack.c.h.b16 %v401
    %v680 = vunpack.c.l.b16 %v402
    %v681 = vunpack.c.h.b16 %v402
    %v682 = vunpack.c.l.b16 %v403
    %v683 = vunpack.c.h.b16 %v403
    %v684 = vunpack.c.l.b16 %v404
    %v685 = vunpack.c.h.b16 %v404
    %v686 = vunpack.c.l.b16 %v405
    %v687 = vunpack.c.h.b16 %v405
    %v688 = vunpack.c.l.b16 %v406
    %v689 = vunpack.c.h.b16 %v406
    %v690 = vunpack.c.l.b16 %v407
    %v691 = vunpack.c.h.b16 %v407
    %v692 = vunpack.c.l.b16 %v408
    %v693 = vunpack.c.h.b16 %v408
    %v694 = vunpack.c.l.b16 %v409
    %v695 = vunpack.c.h.b16 %v409
    %v696 = vunpack.c.l.b16 %v410
    %v697 = vunpack.c.h.b16 %v410
    %v698 = vunpack.c.l.b16 %v411
    %v699 = vunpack.c.h.b16 %v411
    %v700 = vunpack.c.l.b16 %v412
    %v701 = vunpack.c.h.b16 %v412
    %v702 = vunpack.c.l.b16 %v413
    %v703 = vunpack.c.h.b16 %v413
    %v704 = vunpack.c.l.b16 %v414
    %v705 = vunpack.c.h.b16 %v414
    %v706 = vunpack.c.l.b16 %v415
    %v707 = vunpack.c.h.b16 %v415
    %v708 = vunpack.c.l.b16 %v416
    %v709 = vunpack.c.h.b16 %v416
    %v710 = vunpack.c.l.b16 %v417
    %v711 = vunpack.c.h.b16 %v417
    %v712 = vunpack.c.l.b16 %v418
    %v713 = vunpack.c.h.b16 %v418
    %v714 = vunpack.c.l.b16 %v419
    %v715 = vunpack.c.h.b16 %v419
    %v716 = vunpack.c.l.b16 %v420
    %v717 = vunpack.c.h.b16 %v420
    %v718 = vunpack.c.l.b16 %v421
    %v719 = vunpack.c.h.b16 %v421
    %v720 = vunpack.c.l.b16 %v422
    %v721 = vunpack.c.h.b16 %v422
    %v722 = vunpack.c.l.b16 %v423
    %v723 = vunpack.c.h.b16 %v423
    %v724 = vunpack.c.l.b16 %v424
    %v725 = vunpack.c.h.b16 %v424
    %v726 = vunpack.c.l.b16 %v425
    %v727 = vunpack.c.h.b16 %v425
    %v728 = vunpack.c.l.b16 %v426
    %v729 = vunpack.c.h.b16 %v426
    %v730 = vunpack.c.l.b16 %v427
    %v731 = vunpack.c.h.b16 %v427
    %v732 = vunpack.c.l.b16 %v428
    %v733 = vunpack.c.h.b16 %v428
    %v734 = vunpack.c.l.b16 %v429
    %v735 = vunpack.c.h.b16 %v429
    %v736 = vunpack.c.l.b16 %v430
    %v737 = vunpack.c.h.b16 %v430
    %v738 = vunpack.c.l.b16 %v431
    %v739 = vunpack.c.h.b16 %v431
    %v740 = vunpack.c.l.b16 %v432
    %v741 = vunpack.c.h.b16 %v432
    %v742 = vunpack.c.l.b16 %v433
    %v743 = vunpack.c.h.b16 %v433
    %v744 = vunpack.c.l.b16 %v434
    %v745 = vunpack.c.h.b16 %v434
    %v746 = vunpack.c.l.b16 %v435
    %v747 = vunpack.c.h.b16 %v435
    %v748 = vunpack.c.l.b16 %v436
    %v749 = vunpack.c.h.b16 %v436
    %v750 = vunpack.c.l.b16 %v437
    %v751 = vunpack.c.h.b16 %v437
    %v752 = vunpack.c.l.b16 %v438
    %v753 = vunpack.c.h.b16 %v438
    %v754 = vunpack.c.l.b16 %v439
    %v755 = vunpack.c.h.b16 %v439
    %v756 = vunpack.c.l.b16 %v440
    %v757 = vunpack.c.h.b16 %v440
    %v758 = vunpack.c.l.b16 %v441
    %v759 = vunpack.c.h.b16 %v441
    %v760 = vunpack.c.l.b16 %v442
    %v761 = vunpack.c.h.b16 %v442
    %v762 = vunpack.c.l.b16 %v443
    %v763 = vunpack.c.h.b16 %v443
    %v764 = vunpack.c.l.b16 %v444
    %v765 = vunpack.c.h.b16 %v444
    %v766 = vunpack.c.l.b16 %v445
    %v767 = vunpack.c.h.b16 %v445
    %v768 = vunpack.c.l.b16 %v446
    %v769 = vunpack.c.h.b16 %v446
    %v770 = vunpack.c.l.b16 %v447
    %v771 = vunpack.c.h.b16 %v447
    %v772 = vunpack.c.l.b16 %v448
    %v773 = vunpack.c.h.b16 %v448
    %v774 = vunpack.c.l.b16 %v449
    %v775 = vunpack.c.h.b16 %v449
    %v776 = vunpack.c.l.b16 %v450
    %v777 = vunpack.c.h.b16 %v450
    %v778 = vunpack.c.l.b16 %v451
    %v779 = vunpack.c.h.b16 %v451
    %v780 = vunpack.c.l.b16 %v452
    %v781 = vunpack.c.h.b16 %v452
    %v782 = vunpack.c.l.b16 %v453
    %v783 = vunpack.c.h.b16 %v453
    %v784 = vunpack.c.l.b16 %v454
    %v785 = vunpack.c.h.b16 %v454
    %v786 = vunpack.c.l.b16 %v455
    %v787 = vunpack.c.h.b16 %v455
    %v788 = vunpack.c.l.b16 %v456
    %v789 = vunpack.c.h.b16 %v456
    %v790 = vunpack.c.l.b16 %v457
    %v791 = vunpack.c.h.b16 %v457
    %v792 = vunpack.c.l.b16 %v458
    %v793 = vunpack.c.h.b16 %v458
    %v794 = vunpack.c.l.b16 %v459
    %v795 = vunpack.c.h.b16 %v459
    %v796 = vunpack.c.l.b16 %v460
    %v797 = vunpack.c.h.b16 %v460
    %v798 = vunpack.c.l.b16 %v461
    %v799 = vunpack.c.h.b16 %v461
    %v800 = vunpack.c.l.b16 %v462
    %v801 = vunpack.c.h.b16 %v462
    %v802 = vunpack.c.l.b16 %v463
    %v803 = vunpack.c.h.b16 %v463
    %v804 = vunpack.c.l.b16 %v464
    %v805 = vunpack.c.h.b16 %v464
    %v806 = vunpack.c.l.b16 %v465
    %v807 = vunpack.c.h.b16 %v465
    %v808 = vunpack.c.l.b16 %v466
    %v809 = vunpack.c.h.b16 %v466
    %v810 = vunpack.c.l.b16 %v467
    %v811 = vunpack.c.h.b16 %v467
    %v812 = vunpack.c.l.b16 %v468
    %v813 = vunpack.c.h.b16 %v468
    %v814 = vunpack.c.l.b16 %v469
    %v815 = vunpack.c.h.b16 %v469
    %v816 = vunpack.c.l.b16 %v470
    %v817 = vunpack.c.h.b16 %v470
    %v818 = vunpack.c.l.b16 %v471
    %v819 = vunpack.c.h.b16 %v471
    %v820 = vunpack.c.l.b16 %v472
    %v821 = vunpack.c.h.b16 %v472
    %v822 = vunpack.c.l.b16 %v473
    %v823 = vunpack.c.h.b16 %v473
    %v824 = vunpack.c.l.b16 %v474
    %v825 = vunpack.c.h.b16 %v474
    %v826 = vunpack.c.l.b16 %v475
    %v827 = vunpack.c.h.b16 %v475
    %v828 = vunpack.c.l.b16 %v476
    %v829 = vunpack.c.h.b16 %v476
    %v830 = vunpack.c.l.b16 %v477
    %v831 = vunpack.c.h.b16 %v477
    %v832 = vunpack.c.l.b16 %v478
    %v833 = vunpack.c.h.b16 %v478
    %v834 = vunpack.c.l.b16 %v479
    %v835 = vunpack.c.h.b16 %v479
    %v836 = vunpack.c.l.b16 %v480
    %v837 = vunpack.c.h.b16 %v480
    %v838 = vunpack.c.l.b16 %v481
    %v839 = vunpack.c.h.b16 %v481
    %v840 = vunpack.c.l.b16 %v482
    %v841 = vunpack.c.h.b16 %v482
    %v842 = vunpack.c.l.b16 %v483
    %v843 = vunpack.c.h.b16 %v483
    %v844 = vunpack.c.l.b16 %v484
    %v845 = vunpack.c.h.b16 %v484
    %v846 = vunpack.c.l.b16 %v485
    %v847 = vunpack.c.h.b16 %v485
    %v848 = vunpack.c.l.b16 %v486
    %v849 = vunpack.c.h.b16 %v486
    %v850 = vunpack.c.l.b16 %v487
    %v851 = vunpack.c.h.b16 %v487
    %v852 = vunpack.c.l.b16 %v488
    %v853 = vunpack.c.h.b16 %v488
    %v854 = vunpack.c.l.b16 %v489
    %v855 = vunpack.c.h.b16 %v489
    %v856 = vunpack.c.l.b16 %v490
    %v857 = vunpack.c.h.b16 %v490
    %v858 = vunpack.c.l.b16 %v491
    %v859 = vunpack.c.h.b16 %v491
    %v860 = vunpack.c.l.b16 %v492
    %v861 = vunpack.c.h.b16 %v492
    %v862 = vunpack.c.l.b16 %v493
    %v863 = vunpack.c.h.b16 %v493
    %v864 = vunpack.c.l.b16 %v494
    %v865 = vunpack.c.h.b16 %v494
    %v866 = vunpack.c.l.b16 %v495
    %v867 = vunpack.c.h.b16 %v495
    %v868 = vunpack.c.l.b16 %v496
    %v869 = vunpack.c.h.b16 %v496
    %v870 = vunpack.c.l.b16 %v497
    %v871 = vunpack.c.h.b16 %v497
    %v872 = vunpack.c.l.b16 %v498
    %v873 = vunpack.c.h.b16 %v498
    %v874 = vunpack.c.l.b16 %v499
    %v875 = vunpack.c.h.b16 %v499
    %v876 = vunpack.c.l.b16 %v500
    %v877 = vunpack.c.h.b16 %v500
    %v878 = vunpack.c.l.b16 %v501
    %v879 = vunpack.c.h.b16 %v501
    %v880 = vunpack.c.l.b16 %v502
    %v881 = vunpack.c.h.b16 %v502
    %v882 = vunpack.c.l.b16 %v503
    %v883 = vunpack.c.h.b16 %v503
    %v884 = vunpack.c.l.b16 %v504
    %v885 = vunpack.c.h.b16 %v504
    %v886 = vunpack.c.l.b16 %v505
    %v887 = vunpack.c.h.b16 %v505
    %v888 = vunpack.c.l.b16 %v506
    %v889 = vunpack.c.h.b16 %v506
    %v890 = vunpack.c.l.b16 %v507
    %v891 = vunpack.c.h.b16 %v507
    %v892 = vunpack.c.l.b16 %v508
    %v893 = vunpack.c.h.b16 %v508
    %v894 = vunpack.c.l.b16 %v509
    %v895 = vunpack.c.h.b16 %v509
    %v896 = vunpack.c.l.b16 %v510
    %v897 = vunpack.c.h.b16 %v510
    %v898 = vunpack.c.l.b16 %v511
    %v899 = vunpack.c.h.b16 %v511
    %v900 = vunpack.c.l.b16 %v512
    %v901 = vunpack.c.h.b16 %v512
    %v902 = vunpack.c.l.b16 %v513
    %v903 = vunpack.c.h.b16 %v513
    %v904 = vunpack.c.l.b16 %v514
    %v905 = vunpack.c.h.b16 %v514
    %v906 = vunpack.c.l.b16 %v515
    %v907 = vunpack.c.h.b16 %v515
    %v908 = vunpack.c.l.b16 %v516
    %v909 = vunpack.c.h.b16 %v516
    %v910 = vunpack.c.l.b16 %v517
    %v911 = vunpack.c.h.b16 %v517
    %v912 = vpack.c.b16 %v660, %v656
    %v913 = vpack.c.b16 %v661, %v657
    %v914 = vpack.c.b16 %v662, %v658
    %v915 = vpack.c.b16 %v663, %v659
    %v916 = vpack.c.b16 %v668, %v664
    %v917 = vpack.c.b16 %v669, %v665
    %v918 = vpack.c.b16 %v670, %v666
    %v919 = vpack.c.b16 %v671, %v667
    %v920 = vpack.c.b16 %v676, %v672
    %v921 = vpack.c.b16 %v677, %v673
    %v922 = vpack.c.b16 %v678, %v674
    %v923 = vpack.c.b16 %v679, %v675
    %v924 = vpack.c.b16 %v684, %v680
    %v925 = vpack.c.b16 %v685, %v681
    %v926 = vpack.c.b16 %v686, %v682
    %v927 = vpack.c.b16 %v687, %v683
    %v928 = vpack.c.b16 %v692, %v688
    %v929 = vpack.c.b16 %v693, %v689
    %v930 = vpack.c.b16 %v694, %v690
    %v931 = vpack.c.b16 %v695, %v691
    %v932 = vpack.c.b16 %v700, %v696
    %v933 = vpack.c.b16 %v701, %v697
    %v934 = vpack.c.b16 %v702, %v698
    %v935 = vpack.c.b16 %v703, %v699
    %v936 = vpack.c.b16 %v708, %v704
    %v937 = vpack.c.b16 %v709, %v705
    %v938 = vpack.c.b16 %v710, %v706
    %v939 = vpack.c.b16 %v711, %v707
    %v940 = vpack.c.b16 %v716, %v712
    %v941 = vpack.c.b16 %v717, %v713
    %v942 = vpack.c.b16 %v718, %v714
    %v943 = vpack.c.b16 %v719, %v715
    %v944 = vpack.c.b16 %v724, %v720
    %v945 = vpack.c.b16 %v725, %v721
    %v946 = vpack.c.b16 %v726, %v722
    %v947 = vpack.c.b16 %v727, %v723
    %v948 = vpack.c.b16 %v732, %v728
    %v949 = vpack.c.b16 %v733, %v729
    %v950 = vpack.c.b16 %v734, %v730
    %v951 = vpack.c.b16 %v735, %v731
    %v952 = vpack.c.b16 %v740, %v736
    %v953 = vpack.c.b16 %v741, %v737
    %v954 = vpack.c.b16 %v742, %v738
    %v955 = vpack.c.b16 %v743, %v739
    %v956 = vpack.c.b16 %v748, %v744
    %v957 = vpack.c.b16 %v749, %v745
    %v958 = vpack.c.b16 %v750, %v746
    %v959 = vpack.c.b16 %v751, %v747
    %v960 = vpack.c.b16 %v756, %v752
    %v961 = vpack.c.b16 %v757, %v753
    %v962 = vpack.c.b16 %v758, %v754
    %v963 = vpack.c.b16 %v759, %v755
    %v964 = vpack.c.b16 %v764, %v760
    %v965 = vpack.c.b16 %v765, %v761
    %v966 = vpack.c.b16 %v766, %v762
    %v967 = vpack.c.b16 %v767, %v763
    %v968 = vpack.c.b16 %v772, %v768
    %v969 = vpack.c.b16 %v773, %v769
    %v970 = vpack.c.b16 %v774, %v770
    %v971 = vpack.c.b16 %v775, %v771
    %v972 = vpack.c.b16 %v780, %v776
    %v973 = vpack.c.b16 %v781, %v777
    %v974 = vpack.c.b16 %v782, %v778
    %v975 = vpack.c.b16 %v783, %v779
    %v976 = vpack.c.b16 %v788, %v784
    %v977 = vpack.c.b16 %v789, %v785
    %v978 = vpack.c.b16 %v790, %v786
    %v979 = vpack.c.b16 %v791, %v787
    %v980 = vpack.c.b16 %v796, %v792
    %v981 = vpack.c.b16 %v797, %v793
    %v982 = vpack.c.b16 %v798, %v794
    %v983 = vpack.c.b16 %v799, %v795
    %v984 = vpack.c.b16 %v804, %v800
    %v985 = vpack.c.b16 %v805, %v801
    %v986 = vpack.c.b16 %v806, %v802
    %v987 = vpack.c.b16 %v807, %v803
    %v988 = vpack.c.b16 %v812, %v808
    %v989 = vpack.c.b16 %v813, %v809
    %v990 = vpack.c.b16 %v814, %v810
    %v991 = vpack.c.b16 %v815, %v811
    %v992 = vpack.c.b16 %v820, %v816
    %v993 = vpack.c.b16 %v821, %v817
    %v994 = vpack.c.b16 %v822, %v818
    %v995 = vpack.c.b16 %v823, %v819
    %v996 = vpack.c.b16 %v828, %v824
    %v997 = vpack.c.b16 %v829, %v825
    %v998 = vpack.c.b16 %v830, %v826
    %v999 = vpack.c.b16 %v831, %v827
    %v1000 = vpack.c.b16 %v836, %v832
    %v1001 = vpack.c.b16 %v837, %v833
    %v1002 = vpack.c.b16 %v838, %v834
    %v1003 = vpack.c.b16 %v839, %v835
    %v1004 = vpack.c.b16 %v844, %v840
    %v1005 = vpack.c.b16 %v845, %v841
    %v1006 = vpack.c.b16 %v846, %v842
    %v1007 = vpack.c.b16 %v847, %v843
    %v1008 = vpack.c.b16 %v852, %v848
    %v1009 = vpack.c.b16 %v853, %v849
    %v1010 = vpack.c.b16 %v854, %v850
    %v1011 = vpack.c.b16 %v855, %v851
    %v1012 = vpack.c.b16 %v860, %v856
    %v1013 = vpack.c.b16 %v861, %v857
    %v1014 = vpack.c.b16 %v862, %v858
    %v1015 = vpack.c.b16 %v863, %v859
    %v1016 = vpack.c.b16 %v868, %v864
    %v1017 = vpack.c.b16 %v869, %v865
    %v1018 = vpack.c.b16 %v870, %v866
    %v1019 = vpack.c.b16 %v871, %v867
    %v1020 = vpack.c.b16 %v876, %v872
    %v1021 = vpack.c.b16 %v877, %v873
    %v1022 = vpack.c.b16 %v878, %v874
    %v1023 = vpack.c.b16 %v879, %v875
    %v1024 = vpack.c.b16 %v884, %v880
    %v1025 = vpack.c.b16 %v885, %v881
    %v1026 = vpack.c.b16 %v886, %v882
    %v1027 = vpack.c.b16 %v887, %v883
    %v1028 = vpack.c.b16 %v892, %v888
    %v1029 = vpack.c.b16 %v893, %v889
    %v1030 = vpack.c.b16 %v894, %v890
    %v1031 = vpack.c.b16 %v895, %v891
    %v1032 = vpack.c.b16 %v900, %v896
    %v1033 = vpack.c.b16 %v901, %v897
    %v1034 = vpack.c.b16 %v902, %v898
    %v1035 = vpack.c.b16 %v903, %v899
    %v1036 = vpack.c.b16 %v908, %v904
    %v1037 = vpack.c.b16 %v909, %v905
    %v1038 = vpack.c.b16 %v910, %v906
    %v1039 = vpack.c.b16 %v911, %v907
    %1168 = vmatpush.bf16.msra.mxu0 %v940
    %1169 = vmatpush.bf16.msra.mxu0 %v936
    %1170 = vmatpush.bf16.msra.mxu0 %v932
    %1171 = vmatpush.bf16.msra.mxu0 %v928
    %1172 = vmatpush.bf16.msra.mxu0 %v924
    %1173 = vmatpush.bf16.msra.mxu0 %v920
    %1174 = vmatpush.bf16.msra.mxu0 %v916
    %1175 = vmatpush.bf16.msra.mxu0 %v912
    %1176 = vmatmul.bf16.gmra.mxu0 %v386
    %v1177 = vpop.f32.mrf.mxu0
    %v1178 = vadd.f32 %v520, %v1177
    %v1179 = vpop.f32.mrf.mxu0
    %v1180 = vadd.f32 %v520, %v1179
    %1181 = vdwg.mxu0
    %1182 = vmatpush.bf16.msra.mxu0 %v972
    %1183 = vmatpush.bf16.msra.mxu0 %v968
    %1184 = vmatpush.bf16.msra.mxu0 %v964
    %1185 = vmatpush.bf16.msra.mxu0 %v960
    %1186 = vmatpush.bf16.msra.mxu0 %v956
    %1187 = vmatpush.bf16.msra.mxu0 %v952
    %1188 = vmatpush.bf16.msra.mxu0 %v948
    %1189 = vmatpush.bf16.msra.mxu0 %v944
    %1190 = vmatmul.bf16.gmra.mxu0 %v387
    %v1191 = vpop.f32.mrf.mxu0
    %v1192 = vadd.f32 %v1178, %v1191
    %v1193 = vpop.f32.mrf.mxu0
    %v1194 = vadd.f32 %v1180, %v1193
    %1195 = vdwg.mxu0
    %1196 = vmatpush.bf16.msra.mxu0 %v1004
    %1197 = vmatpush.bf16.msra.mxu0 %v1000
    %1198 = vmatpush.bf16.msra.mxu0 %v996
    %1199 = vmatpush.bf16.msra.mxu0 %v992
    %1200 = vmatpush.bf16.msra.mxu0 %v988
    %1201 = vmatpush.bf16.msra.mxu0 %v984
    %1202 = vmatpush.bf16.msra.mxu0 %v980
    %1203 = vmatpush.bf16.msra.mxu0 %v976
    %1204 = vmatmul.bf16.gmra.mxu0 %v388
    %v1205 = vpop.f32.mrf.mxu0
    %v1206 = vadd.f32 %v1192, %v1205
    %v1207 = vpop.f32.mrf.mxu0
    %v1208 = vadd.f32 %v1194, %v1207
    %1209 = vdwg.mxu0
    %1210 = vmatpush.bf16.msra.mxu0 %v1036
    %1211 = vmatpush.bf16.msra.mxu0 %v1032
    %1212 = vmatpush.bf16.msra.mxu0 %v1028
    %1213 = vmatpush.bf16.msra.mxu0 %v1024
    %1214 = vmatpush.bf16.msra.mxu0 %v1020
    %1215 = vmatpush.bf16.msra.mxu0 %v1016
    %1216 = vmatpush.bf16.msra.mxu0 %v1012
    %1217 = vmatpush.bf16.msra.mxu0 %v1008
    %1218 = vmatmul.bf16.gmra.mxu0 %v389
    %v1219 = vpop.f32.mrf.mxu0
    %v1220 = vadd.f32 %v1206, %v1219
    %v1221 = vpop.f32.mrf.mxu0
    %v1222 = vadd.f32 %v1208, %v1221
    %1223 = vdwg.mxu0
    %1224 = vmatpush.bf16.msra.mxu0 %v941
    %1225 = vmatpush.bf16.msra.mxu0 %v937
    %1226 = vmatpush.bf16.msra.mxu0 %v933
    %1227 = vmatpush.bf16.msra.mxu0 %v929
    %1228 = vmatpush.bf16.msra.mxu0 %v925
    %1229 = vmatpush.bf16.msra.mxu0 %v921
    %1230 = vmatpush.bf16.msra.mxu0 %v917
    %1231 = vmatpush.bf16.msra.mxu0 %v913
    %1232 = vmatmul.bf16.gmra.mxu0 %v386
    %v1233 = vpop.f32.mrf.mxu0
    %v1234 = vadd.f32 %v521, %v1233
    %v1235 = vpop.f32.mrf.mxu0
    %v1236 = vadd.f32 %v521, %v1235
    %1237 = vdwg.mxu0
    %1238 = vmatpush.bf16.msra.mxu0 %v973
    %1239 = vmatpush.bf16.msra.mxu0 %v969
    %1240 = vmatpush.bf16.msra.mxu0 %v965
    %1241 = vmatpush.bf16.msra.mxu0 %v961
    %1242 = vmatpush.bf16.msra.mxu0 %v957
    %1243 = vmatpush.bf16.msra.mxu0 %v953
    %1244 = vmatpush.bf16.msra.mxu0 %v949
    %1245 = vmatpush.bf16.msra.mxu0 %v945
    %1246 = vmatmul.bf16.gmra.mxu0 %v387
    %v1247 = vpop.f32.mrf.mxu0
    %v1248 = vadd.f32 %v1234, %v1247
    %v1249 = vpop.f32.mrf.mxu0
    %v1250 = vadd.f32 %v1236, %v1249
    %1251 = vdwg.mxu0
    %1252 = vmatpush.bf16.msra.mxu0 %v1005
    %1253 = vmatpush.bf16.msra.mxu0 %v1001
    %1254 = vmatpush.bf16.msra.mxu0 %v997
    %1255 = vmatpush.bf16.msra.mxu0 %v993
    %1256 = vmatpush.bf16.msra.mxu0 %v989
    %1257 = vmatpush.bf16.msra.mxu0 %v985
    %1258 = vmatpush.bf16.msra.mxu0 %v981
    %1259 = vmatpush.bf16.msra.mxu0 %v977
    %1260 = vmatmul.bf16.gmra.mxu0 %v388
    %v1261 = vpop.f32.mrf.mxu0
    %v1262 = vadd.f32 %v1248, %v1261
    %v1263 = vpop.f32.mrf.mxu0
    %v1264 = vadd.f32 %v1250, %v1263
    %1265 = vdwg.mxu0
    %1266 = vmatpush.bf16.msra.mxu0 %v1037
    %1267 = vmatpush.bf16.msra.mxu0 %v1033
    %1268 = vmatpush.bf16.msra.mxu0 %v1029
    %1269 = vmatpush.bf16.msra.mxu0 %v1025
    %1270 = vmatpush.bf16.msra.mxu0 %v1021
    %1271 = vmatpush.bf16.msra.mxu0 %v1017
    %1272 = vmatpush.bf16.msra.mxu0 %v1013
    %1273 = vmatpush.bf16.msra.mxu0 %v1009
    %1274 = vmatmul.bf16.gmra.mxu0 %v389
    %v1275 = vpop.f32.mrf.mxu0
    %v1276 = vadd.f32 %v1262, %v1275
    %v1277 = vpop.f32.mrf.mxu0
    %v1278 = vadd.f32 %v1264, %v1277
    %1279 = vdwg.mxu0
    %1280 = vmatpush.bf16.msra.mxu0 %v942
    %1281 = vmatpush.bf16.msra.mxu0 %v938
    %1282 = vmatpush.bf16.msra.mxu0 %v934
    %1283 = vmatpush.bf16.msra.mxu0 %v930
    %1284 = vmatpush.bf16.msra.mxu0 %v926
    %1285 = vmatpush.bf16.msra.mxu0 %v922
    %1286 = vmatpush.bf16.msra.mxu0 %v918
    %1287 = vmatpush.bf16.msra.mxu0 %v914
    %1288 = vmatmul.bf16.gmra.mxu0 %v386
    %v1289 = vpop.f32.mrf.mxu0
    %v1290 = vadd.f32 %v522, %v1289
    %v1291 = vpop.f32.mrf.mxu0
    %v1292 = vadd.f32 %v522, %v1291
    %1293 = vdwg.mxu0
    %1294 = vmatpush.bf16.msra.mxu0 %v974
    %1295 = vmatpush.bf16.msra.mxu0 %v970
    %1296 = vmatpush.bf16.msra.mxu0 %v966
    %1297 = vmatpush.bf16.msra.mxu0 %v962
    %1298 = vmatpush.bf16.msra.mxu0 %v958
    %1299 = vmatpush.bf16.msra.mxu0 %v954
    %1300 = vmatpush.bf16.msra.mxu0 %v950
    %1301 = vmatpush.bf16.msra.mxu0 %v946
    %1302 = vmatmul.bf16.gmra.mxu0 %v387
    %v1303 = vpop.f32.mrf.mxu0
    %v1304 = vadd.f32 %v1290, %v1303
    %v1305 = vpop.f32.mrf.mxu0
    %v1306 = vadd.f32 %v1292, %v1305
    %1307 = vdwg.mxu0
    %1308 = vmatpush.bf16.msra.mxu0 %v1006
    %1309 = vmatpush.bf16.msra.mxu0 %v1002
    %1310 = vmatpush.bf16.msra.mxu0 %v998
    %1311 = vmatpush.bf16.msra.mxu0 %v994
    %1312 = vmatpush.bf16.msra.mxu0 %v990
    %1313 = vmatpush.bf16.msra.mxu0 %v986
    %1314 = vmatpush.bf16.msra.mxu0 %v982
    %1315 = vmatpush.bf16.msra.mxu0 %v978
    %1316 = vmatmul.bf16.gmra.mxu0 %v388
    %v1317 = vpop.f32.mrf.mxu0
    %v1318 = vadd.f32 %v1304, %v1317
    %v1319 = vpop.f32.mrf.mxu0
    %v1320 = vadd.f32 %v1306, %v1319
    %1321 = vdwg.mxu0
    %1322 = vmatpush.bf16.msra.mxu0 %v1038
    %1323 = vmatpush.bf16.msra.mxu0 %v1034
    %1324 = vmatpush.bf16.msra.mxu0 %v1030
    %1325 = vmatpush.bf16.msra.mxu0 %v1026
    %1326 = vmatpush.bf16.msra.mxu0 %v1022
    %1327 = vmatpush.bf16.msra.mxu0 %v1018
    %1328 = vmatpush.bf16.msra.mxu0 %v1014
    %1329 = vmatpush.bf16.msra.mxu0 %v1010
    %1330 = vmatmul.bf16.gmra.mxu0 %v389
    %v1331 = vpop.f32.mrf.mxu0
    %v1332 = vadd.f32 %v1318, %v1331
    %v1333 = vpop.f32.mrf.mxu0
    %v1334 = vadd.f32 %v1320, %v1333
    %1335 = vdwg.mxu0
    %1336 = vmatpush.bf16.msra.mxu0 %v943
    %1337 = vmatpush.bf16.msra.mxu0 %v939
    %1338 = vmatpush.bf16.msra.mxu0 %v935
    %1339 = vmatpush.bf16.msra.mxu0 %v931
    %1340 = vmatpush.bf16.msra.mxu0 %v927
    %1341 = vmatpush.bf16.msra.mxu0 %v923
    %1342 = vmatpush.bf16.msra.mxu0 %v919
    %1343 = vmatpush.bf16.msra.mxu0 %v915
    %1344 = vmatmul.bf16.gmra.mxu0 %v386
    %v1345 = vpop.f32.mrf.mxu0
    %v1346 = vadd.f32 %v523, %v1345
    %v1347 = vpop.f32.mrf.mxu0
    %v1348 = vadd.f32 %v523, %v1347
    %1349 = vdwg.mxu0
    %1350 = vmatpush.bf16.msra.mxu0 %v975
    %1351 = vmatpush.bf16.msra.mxu0 %v971
    %1352 = vmatpush.bf16.msra.mxu0 %v967
    %1353 = vmatpush.bf16.msra.mxu0 %v963
    %1354 = vmatpush.bf16.msra.mxu0 %v959
    %1355 = vmatpush.bf16.msra.mxu0 %v955
    %1356 = vmatpush.bf16.msra.mxu0 %v951
    %1357 = vmatpush.bf16.msra.mxu0 %v947
    %1358 = vmatmul.bf16.gmra.mxu0 %v387
    %v1359 = vpop.f32.mrf.mxu0
    %v1360 = vadd.f32 %v1346, %v1359
    %v1361 = vpop.f32.mrf.mxu0
    %v1362 = vadd.f32 %v1348, %v1361
    %1363 = vdwg.mxu0
    %1364 = vmatpush.bf16.msra.mxu0 %v1007
    %1365 = vmatpush.bf16.msra.mxu0 %v1003
    %1366 = vmatpush.bf16.msra.mxu0 %v999
    %1367 = vmatpush.bf16.msra.mxu0 %v995
    %1368 = vmatpush.bf16.msra.mxu0 %v991
    %1369 = vmatpush.bf16.msra.mxu0 %v987
    %1370 = vmatpush.bf16.msra.mxu0 %v983
    %1371 = vmatpush.bf16.msra.mxu0 %v979
    %1372 = vmatmul.bf16.gmra.mxu0 %v388
    %v1373 = vpop.f32.mrf.mxu0
    %v1374 = vadd.f32 %v1360, %v1373
    %v1375 = vpop.f32.mrf.mxu0
    %v1376 = vadd.f32 %v1362, %v1375
    %1377 = vdwg.mxu0
    %1378 = vmatpush.bf16.msra.mxu0 %v1039
    %1379 = vmatpush.bf16.msra.mxu0 %v1035
    %1380 = vmatpush.bf16.msra.mxu0 %v1031
    %1381 = vmatpush.bf16.msra.mxu0 %v1027
    %1382 = vmatpush.bf16.msra.mxu0 %v1023
    %1383 = vmatpush.bf16.msra.mxu0 %v1019
    %1384 = vmatpush.bf16.msra.mxu0 %v1015
    %1385 = vmatpush.bf16.msra.mxu0 %v1011
    %1386 = vmatmul.bf16.gmra.mxu0 %v389
    %v1387 = vpop.f32.mrf.mxu0
    %v1388 = vadd.f32 %v1374, %v1387
    %v1389 = vpop.f32.mrf.mxu0
    %v1390 = vadd.f32 %v1376, %v1389
    %1391 = vdwg.mxu0
    %v1392 = vmax.f32 %v1220, 0.0
    %v1393 = vmax.f32 %v1276, 0.0
    %v1394 = vmax.f32 %v1332, 0.0
    %v1395 = vmax.f32 %v1388, 0.0
    %v1396 = vmax.f32 %v1222, 0.0
    %v1397 = vmax.f32 %v1278, 0.0
    %v1398 = vmax.f32 %v1334, 0.0
    %v1399 = vmax.f32 %v1390, 0.0
    %v1400 = vpack.c.bf16 %v1396, %v1392
    %v1401 = vpack.c.bf16 %v1397, %v1393
    %v1402 = vpack.c.bf16 %v1398, %v1394
    %v1403 = vpack.c.bf16 %v1399, %v1395
    %v1404 = vld [vmem:[#allocation11] sm:$0xf]
    %v1405 = vld [vmem:[#allocation11 + $0x4] sm:$0xf]
    %v1406 = vld [vmem:[#allocation11 + $0x8] sm:$0xf]
    %v1407 = vld [vmem:[#allocation11 + $0xc] sm:$0xf]
    %v1408 = vld [vmem:[#allocation11 + $0x10] sm:$0xf]
    %v1409 = vld [vmem:[#allocation11 + $0x14] sm:$0xf]
    %v1410 = vld [vmem:[#allocation11 + $0x18] sm:$0xf]
    %v1411 = vld [vmem:[#allocation11 + $0x1c] sm:$0xf]
    %v1412 = vld [vmem:[#allocation11 + $0x20] sm:$0xf]
    %v1413 = vld [vmem:[#allocation11 + $0x24] sm:$0xf]
    %v1414 = vld [vmem:[#allocation11 + $0x28] sm:$0xf]
    %v1415 = vld [vmem:[#allocation11 + $0x2c] sm:$0xf]
    %v1416 = vld [vmem:[#allocation11 + $0x30] sm:$0xf]
    %v1417 = vld [vmem:[#allocation11 + $0x34] sm:$0xf]
    %v1418 = vld [vmem:[#allocation11 + $0x38] sm:$0xf]
    %v1419 = vld [vmem:[#allocation11 + $0x3c] sm:$0xf]
    %v1420 = vld [vmem:[#allocation11 + $0x40] sm:$0xf]
    %v1421 = vld [vmem:[#allocation11 + $0x44] sm:$0xf]
    %v1422 = vld [vmem:[#allocation11 + $0x48] sm:$0xf]
    %v1423 = vld [vmem:[#allocation11 + $0x4c] sm:$0xf]
    %v1424 = vld [vmem:[#allocation11 + $0x50] sm:$0xf]
    %v1425 = vld [vmem:[#allocation11 + $0x54] sm:$0xf]
    %v1426 = vld [vmem:[#allocation11 + $0x58] sm:$0xf]
    %v1427 = vld [vmem:[#allocation11 + $0x5c] sm:$0xf]
    %v1428 = vld [vmem:[#allocation11 + $0x60] sm:$0xf]
    %v1429 = vld [vmem:[#allocation11 + $0x64] sm:$0xf]
    %v1430 = vld [vmem:[#allocation11 + $0x68] sm:$0xf]
    %v1431 = vld [vmem:[#allocation11 + $0x6c] sm:$0xf]
    %v1432 = vld [vmem:[#allocation11 + $0x70] sm:$0xf]
    %v1433 = vld [vmem:[#allocation11 + $0x74] sm:$0xf]
    %v1434 = vld [vmem:[#allocation11 + $0x78] sm:$0xf]
    %v1435 = vld [vmem:[#allocation11 + $0x7c] sm:$0xf]
    %v1436 = vld [vmem:[#allocation11 + $0x80] sm:$0xf]
    %v1437 = vld [vmem:[#allocation11 + $0x84] sm:$0xf]
    %v1438 = vld [vmem:[#allocation11 + $0x88] sm:$0xf]
    %v1439 = vld [vmem:[#allocation11 + $0x8c] sm:$0xf]
    %v1440 = vld [vmem:[#allocation11 + $0x90] sm:$0xf]
    %v1441 = vld [vmem:[#allocation11 + $0x94] sm:$0xf]
    %v1442 = vld [vmem:[#allocation11 + $0x98] sm:$0xf]
    %v1443 = vld [vmem:[#allocation11 + $0x9c] sm:$0xf]
    %v1444 = vld [vmem:[#allocation11 + $0xa0] sm:$0xf]
    %v1445 = vld [vmem:[#allocation11 + $0xa4] sm:$0xf]
    %v1446 = vld [vmem:[#allocation11 + $0xa8] sm:$0xf]
    %v1447 = vld [vmem:[#allocation11 + $0xac] sm:$0xf]
    %v1448 = vld [vmem:[#allocation11 + $0xb0] sm:$0xf]
    %v1449 = vld [vmem:[#allocation11 + $0xb4] sm:$0xf]
    %v1450 = vld [vmem:[#allocation11 + $0xb8] sm:$0xf]
    %v1451 = vld [vmem:[#allocation11 + $0xbc] sm:$0xf]
    %v1452 = vld [vmem:[#allocation11 + $0xc0] sm:$0xf]
    %v1453 = vld [vmem:[#allocation11 + $0xc4] sm:$0xf]
    %v1454 = vld [vmem:[#allocation11 + $0xc8] sm:$0xf]
    %v1455 = vld [vmem:[#allocation11 + $0xcc] sm:$0xf]
    %v1456 = vld [vmem:[#allocation11 + $0xd0] sm:$0xf]
    %v1457 = vld [vmem:[#allocation11 + $0xd4] sm:$0xf]
    %v1458 = vld [vmem:[#allocation11 + $0xd8] sm:$0xf]
    %v1459 = vld [vmem:[#allocation11 + $0xdc] sm:$0xf]
    %v1460 = vld [vmem:[#allocation11 + $0xe0] sm:$0xf]
    %v1461 = vld [vmem:[#allocation11 + $0xe4] sm:$0xf]
    %v1462 = vld [vmem:[#allocation11 + $0xe8] sm:$0xf]
    %v1463 = vld [vmem:[#allocation11 + $0xec] sm:$0xf]
    %v1464 = vld [vmem:[#allocation11 + $0xf0] sm:$0xf]
    %v1465 = vld [vmem:[#allocation11 + $0xf4] sm:$0xf]
    %v1466 = vld [vmem:[#allocation11 + $0xf8] sm:$0xf]
    %v1467 = vld [vmem:[#allocation11 + $0xfc] sm:$0xf]
    %v1468 = vld [vmem:[%s6] sm:$0x1]
    %v1470 = vperm.slane %v1468, 0
    %v1536 = vunpack.c.l.b16 %v1404
    %v1537 = vunpack.c.l.b16 %v1405
    %v1538 = vunpack.c.l.b16 %v1406
    %v1539 = vunpack.c.l.b16 %v1407
    %v1540 = vunpack.c.l.b16 %v1408
    %v1541 = vunpack.c.l.b16 %v1409
    %v1542 = vunpack.c.l.b16 %v1410
    %v1543 = vunpack.c.l.b16 %v1411
    %v1544 = vunpack.c.l.b16 %v1412
    %v1545 = vunpack.c.l.b16 %v1413
    %v1546 = vunpack.c.l.b16 %v1414
    %v1547 = vunpack.c.l.b16 %v1415
    %v1548 = vunpack.c.l.b16 %v1416
    %v1549 = vunpack.c.l.b16 %v1417
    %v1550 = vunpack.c.l.b16 %v1418
    %v1551 = vunpack.c.l.b16 %v1419
    %v1552 = vunpack.c.l.b16 %v1420
    %v1553 = vunpack.c.l.b16 %v1421
    %v1554 = vunpack.c.l.b16 %v1422
    %v1555 = vunpack.c.l.b16 %v1423
    %v1556 = vunpack.c.l.b16 %v1424
    %v1557 = vunpack.c.l.b16 %v1425
    %v1558 = vunpack.c.l.b16 %v1426
    %v1559 = vunpack.c.l.b16 %v1427
    %v1560 = vunpack.c.l.b16 %v1428
    %v1561 = vunpack.c.l.b16 %v1429
    %v1562 = vunpack.c.l.b16 %v1430
    %v1563 = vunpack.c.l.b16 %v1431
    %v1564 = vunpack.c.l.b16 %v1432
    %v1565 = vunpack.c.l.b16 %v1433
    %v1566 = vunpack.c.l.b16 %v1434
    %v1567 = vunpack.c.l.b16 %v1435
    %v1568 = vunpack.c.l.b16 %v1436
    %v1569 = vunpack.c.l.b16 %v1437
    %v1570 = vunpack.c.l.b16 %v1438
    %v1571 = vunpack.c.l.b16 %v1439
    %v1572 = vunpack.c.l.b16 %v1440
    %v1573 = vunpack.c.l.b16 %v1441
    %v1574 = vunpack.c.l.b16 %v1442
    %v1575 = vunpack.c.l.b16 %v1443
    %v1576 = vunpack.c.l.b16 %v1444
    %v1577 = vunpack.c.l.b16 %v1445
    %v1578 = vunpack.c.l.b16 %v1446
    %v1579 = vunpack.c.l.b16 %v1447
    %v1580 = vunpack.c.l.b16 %v1448
    %v1581 = vunpack.c.l.b16 %v1449
    %v1582 = vunpack.c.l.b16 %v1450
    %v1583 = vunpack.c.l.b16 %v1451
    %v1584 = vunpack.c.l.b16 %v1452
    %v1585 = vunpack.c.l.b16 %v1453
    %v1586 = vunpack.c.l.b16 %v1454
    %v1587 = vunpack.c.l.b16 %v1455
    %v1588 = vunpack.c.l.b16 %v1456
    %v1589 = vunpack.c.l.b16 %v1457
    %v1590 = vunpack.c.l.b16 %v1458
    %v1591 = vunpack.c.l.b16 %v1459
    %v1592 = vunpack.c.l.b16 %v1460
    %v1593 = vunpack.c.l.b16 %v1461
    %v1594 = vunpack.c.l.b16 %v1462
    %v1595 = vunpack.c.l.b16 %v1463
    %v1596 = vunpack.c.l.b16 %v1464
    %v1597 = vunpack.c.l.b16 %v1465
    %v1598 = vunpack.c.l.b16 %v1466
    %v1599 = vunpack.c.l.b16 %v1467
    %v1600 = vpack.c.b16 %v1537, %v1536
    %v1601 = vpack.c.b16 %v1539, %v1538
    %v1602 = vpack.c.b16 %v1541, %v1540
    %v1603 = vpack.c.b16 %v1543, %v1542
    %v1604 = vpack.c.b16 %v1545, %v1544
    %v1605 = vpack.c.b16 %v1547, %v1546
    %v1606 = vpack.c.b16 %v1549, %v1548
    %v1607 = vpack.c.b16 %v1551, %v1550
    %v1608 = vpack.c.b16 %v1553, %v1552
    %v1609 = vpack.c.b16 %v1555, %v1554
    %v1610 = vpack.c.b16 %v1557, %v1556
    %v1611 = vpack.c.b16 %v1559, %v1558
    %v1612 = vpack.c.b16 %v1561, %v1560
    %v1613 = vpack.c.b16 %v1563, %v1562
    %v1614 = vpack.c.b16 %v1565, %v1564
    %v1615 = vpack.c.b16 %v1567, %v1566
    %v1616 = vpack.c.b16 %v1569, %v1568
    %v1617 = vpack.c.b16 %v1571, %v1570
    %v1618 = vpack.c.b16 %v1573, %v1572
    %v1619 = vpack.c.b16 %v1575, %v1574
    %v1620 = vpack.c.b16 %v1577, %v1576
    %v1621 = vpack.c.b16 %v1579, %v1578
    %v1622 = vpack.c.b16 %v1581, %v1580
    %v1623 = vpack.c.b16 %v1583, %v1582
    %v1624 = vpack.c.b16 %v1585, %v1584
    %v1625 = vpack.c.b16 %v1587, %v1586
    %v1626 = vpack.c.b16 %v1589, %v1588
    %v1627 = vpack.c.b16 %v1591, %v1590
    %v1628 = vpack.c.b16 %v1593, %v1592
    %v1629 = vpack.c.b16 %v1595, %v1594
    %v1630 = vpack.c.b16 %v1597, %v1596
    %v1631 = vpack.c.b16 %v1599, %v1598
    %1664 = vmatpush.bf16.msra.mxu0 %v1607
    %1665 = vmatpush.bf16.msra.mxu0 %v1606
    %1666 = vmatpush.bf16.msra.mxu0 %v1605
    %1667 = vmatpush.bf16.msra.mxu0 %v1604
    %1668 = vmatpush.bf16.msra.mxu0 %v1603
    %1669 = vmatpush.bf16.msra.mxu0 %v1602
    %1670 = vmatpush.bf16.msra.mxu0 %v1601
    %1671 = vmatpush.bf16.msra.mxu0 %v1600
    %1672 = vmatmul.bf16.gmra.mxu0 %v1400
    %v1673 = vpop.f32.mrf.mxu0
    %v1674 = vadd.f32 %v1470, %v1673
    %v1675 = vpop.f32.mrf.mxu0
    %v1676 = vadd.f32 %v1470, %v1675
    %1677 = vdwg.mxu0
    %1678 = vmatpush.bf16.msra.mxu0 %v1615
    %1679 = vmatpush.bf16.msra.mxu0 %v1614
    %1680 = vmatpush.bf16.msra.mxu0 %v1613
    %1681 = vmatpush.bf16.msra.mxu0 %v1612
    %1682 = vmatpush.bf16.msra.mxu0 %v1611
    %1683 = vmatpush.bf16.msra.mxu0 %v1610
    %1684 = vmatpush.bf16.msra.mxu0 %v1609
    %1685 = vmatpush.bf16.msra.mxu0 %v1608
    %1686 = vmatmul.bf16.gmra.mxu0 %v1401
    %v1687 = vpop.f32.mrf.mxu0
    %v1688 = vadd.f32 %v1674, %v1687
    %v1689 = vpop.f32.mrf.mxu0
    %v1690 = vadd.f32 %v1676, %v1689
    %1691 = vdwg.mxu0
    %1692 = vmatpush.bf16.msra.mxu0 %v1623
    %1693 = vmatpush.bf16.msra.mxu0 %v1622
    %1694 = vmatpush.bf16.msra.mxu0 %v1621
    %1695 = vmatpush.bf16.msra.mxu0 %v1620
    %1696 = vmatpush.bf16.msra.mxu0 %v1619
    %1697 = vmatpush.bf16.msra.mxu0 %v1618
    %1698 = vmatpush.bf16.msra.mxu0 %v1617
    %1699 = vmatpush.bf16.msra.mxu0 %v1616
    %1700 = vmatmul.bf16.gmra.mxu0 %v1402
    %v1701 = vpop.f32.mrf.mxu0
    %v1702 = vadd.f32 %v1688, %v1701
    %v1703 = vpop.f32.mrf.mxu0
    %v1704 = vadd.f32 %v1690, %v1703
    %1705 = vdwg.mxu0
    %1706 = vmatpush.bf16.msra.mxu0 %v1631
    %1707 = vmatpush.bf16.msra.mxu0 %v1630
    %1708 = vmatpush.bf16.msra.mxu0 %v1629
    %1709 = vmatpush.bf16.msra.mxu0 %v1628
    %1710 = vmatpush.bf16.msra.mxu0 %v1627
    %1711 = vmatpush.bf16.msra.mxu0 %v1626
    %1712 = vmatpush.bf16.msra.mxu0 %v1625
    %1713 = vmatpush.bf16.msra.mxu0 %v1624
    %1714 = vmatmul.bf16.gmra.mxu0 %v1403
    %v1715 = vpop.f32.mrf.mxu0
    %v1716 = vadd.f32 %v1702, %v1715
    %v1717 = vpop.f32.mrf.mxu0
    %v1718 = vadd.f32 %v1704, %v1717
    %1719 = vdwg.mxu0
    %v1720 = vpack.c.bf16 %v1716, %v1716
    %v1721 = vpack.c.bf16 %v1718, %v1718
    %1722 = vst [vmem:[#allocation13] sm:$0xf] %v1720
    %1723 = vst [vmem:[#allocation13 + $0x4] sm:$0xf] %v1721
    // Predicated region
    $region54: #{tpu_custom_call.1} parent=1 // pred_check
      _
    $region55: #{tpu_custom_call.1} parent=1 // pred_check_branch
      %1725 = sbr.rel (0) target = $region57
    $region56: #{tpu_custom_call.1} parent=1 // pred_region
      %1727 = vsyncadd [#allocation4], 0
      %s1728 = sshll.u32 [#allocation13], 4
      %s1729 = int_to_ptr.vmem [resolvable:$true] %s1728
      %s1730 = sshll.u32 %s7, 4
      %s1731 = int_to_ptr.hbm [resolvable:$true] %s1730
      %1736 = dma.vmem_to_hbm [thread:$0]  %s1729, 128, %s1731, [#allocation4], 64, 64, 4
    $region57: #{tpu_custom_call.1} parent=1 // pred_fallthru
      _
    // Predicated region
    $region58: #{tpu_custom_call.1} parent=1 // pred_check
      _
    $region59: #{tpu_custom_call.1} parent=1 // pred_check_branch
      %1738 = sbr.rel (0) target = $region61
    $region60: #{tpu_custom_call.1} parent=1 // pred_region
      %1740 = dma.done [#allocation4], 128
    $region61: #{tpu_custom_call.1} parent=1 // pred_fallthru
      _
    %1741 = vsyncpa [#allocation3], 1
    %1742 = vsyncpa [#allocation6], 1
    %1743 = vsyncpa [#allocation9], 1
    %1744 = vsyncpa [#allocation12], 1
    %1745 = vsyncpa [#allocation4], 1

</llo_original>
